<compile_context>
chip_gen: v6e
topology: v6e:2x2x1
jax: 0.10.0
libtpu: 0.0.40
codegen_flags: <defaults>
</compile_context>

<pallas_src>
import jax
import jax.numpy as jnp
from jax.experimental import pallas as pl
from jax.experimental.pallas import tpu as pltpu

N_FEATURES = 4
NUM_LAYERS = 8
# layer sizes (out, in): in-200-100-50-3-50-100-200-out
LAYER_DIMS = [(200, N_FEATURES), (100, 200), (50, 100), (3, 50),
              (50, 3), (100, 50), (200, 100), (N_FEATURES, 200)]
WPAD = 256                                                 # padded slab edge (>= max dim)
FLOPS_PER_ROW = 2 * sum(dout * din for dout, din in LAYER_DIMS)   # ~103.8 kFLOP / row
TANH_PER_ROW = sum(dout for dout, _ in LAYER_DIMS[:-1])           # 703 tanh / row


def ae_3d_200_kernel(x_ref, wpk_ref, bpk_ref, o_ref):
    """Whole forward pass (encode + decode) for one (features, batch_tile) tile in VMEM.

    Layout: activations are (features, batch_tile) so batch sits on the 128-lane axis.
    wpk_ref: (8, 256, 256) bf16 weight pack, layer l lives at [l, :dout, :din].
    bpk_ref: (256, 8) f32 bias pack, layer l lives at [:dout, l].
    """
    h = x_ref[...].astype(jnp.bfloat16)                    # (F, TB) -> bf16 MXU input

    def lin(h_bf16, l):
        dout, din = LAYER_DIMS[l]
        w = wpk_ref[l, 0:dout, 0:din]                      # (dout, din) bf16 static view
        b = bpk_ref[0:dout, l:l + 1]                       # (dout, 1)  f32  static view
        # single bf16 MXU pass per 256-lane chunk, f32 accumulation
        return jnp.dot(w, h_bf16, preferred_element_type=jnp.float32) + b

    # forward = en1,tanh, en2,tanh, en3,tanh, en4, tanh, de1,tanh, de2,tanh, de3,tanh, de4
    # i.e. layers 0..6 all feed a tanh (en4's output is tanh'd at the start of decode);
    # the final layer (de4) has no tanh.
    for l in range(NUM_LAYERS - 1):
        h = jnp.tanh(lin(h, l)).astype(jnp.bfloat16)       # tanh in f32, hand-off in bf16
    out = lin(h, NUM_LAYERS - 1)                           # (F, TB) f32
    o_ref[...] = out.astype(o_ref.dtype)


def pack_params(params):
    """Pack PyTorch-layout (W(out,in), b(out,1)) pairs into two resident slabs."""
    assert len(params) == NUM_LAYERS
    wpk = jnp.zeros((NUM_LAYERS, WPAD, WPAD), jnp.bfloat16)
    bpk = jnp.zeros((WPAD, NUM_LAYERS), jnp.float32)
    for l, (w, b) in enumerate(params):
        dout, din = LAYER_DIMS[l]
        assert w.shape == (dout, din) and b.shape[0] == dout
        wpk = wpk.at[l, :dout, :din].set(w.astype(jnp.bfloat16))
        bpk = bpk.at[:dout, l].set(b.reshape(-1).astype(jnp.float32))
    return wpk, bpk


def ae_3d_200_forward(x, params, *, batch_tile=2048):
    """x: (B, n_features) float32. params: list of (W_(out,in), b_(out,1)), PyTorch layout."""
    B, F = x.shape
    assert F == N_FEATURES

    # Lane-dense tiles (multiple of 128); cap at 4096 so live (200,TB) f32 intermediates
    # stay well inside the default scoped-VMEM limit (v7x only has 64 MiB physical VMEM).
    batch_tile = max(128, min((batch_tile // 128) * 128, 4096))
    # Small batches: shrink the tile so the grid has >=2 parallel tiles and both of
    # v7x's TensorCores get work (no-op on single-TC v5e/v6e).
    ceil_half = -(-B // 2)
    two_tile = max(128, -(-ceil_half // 128) * 128)
    batch_tile = min(batch_tile, two_tile)

    n_tiles = -(-B // batch_tile)                          # ceil division
    Bp = n_tiles * batch_tile

    # (features, batch) layout so batch maps to lanes; zero-pad the ragged tail.
    # (Padded columns compute garbage through bias+tanh; they are sliced off below.)
    xT = jnp.pad(x.T.astype(jnp.float32), ((0, 0), (0, Bp - B)))

    wpk, bpk = pack_params(params)

    x_spec = pl.BlockSpec((F, batch_tile), lambda i: (0, i))
    out_spec = pl.BlockSpec((F, batch_tile), lambda i: (0, i))
    # Parameter packs: full-array blocks with constant index_maps -> DMA'd once and
    # resident in VMEM across all (parallel) batch-tile grid steps.
    wpk_spec = pl.BlockSpec(wpk.shape, lambda i: (0, 0, 0))
    bpk_spec = pl.BlockSpec(bpk.shape, lambda i: (0, 0))

    cost = pl.CostEstimate(
        flops=FLOPS_PER_ROW * Bp,
        transcendentals=TANH_PER_ROW * Bp,
        bytes_accessed=2 * F * Bp * 4 + wpk.size * 2 + bpk.size * 4)

    f = pl.pallas_call(
        ae_3d_200_kernel,
        out_shape=jax.ShapeDtypeStruct((F, Bp), jnp.float32),
        grid_spec=pltpu.PrefetchScalarGridSpec(
            num_scalar_prefetch=0,
            grid=(n_tiles,),
            in_specs=[x_spec, wpk_spec, bpk_spec],
            out_specs=out_spec),
        compiler_params=pltpu.CompilerParams(
            dimension_semantics=("parallel",)),
        cost_estimate=cost,
    )
    outT = f(xT, wpk, bpk)                                 # (F, Bp)
    return outT[:, :B].T.astype(x.dtype)                   # back to (B, F)


def init_params(key):
    """Deterministic init mimicking PyTorch nn.Linear default (U[-1/sqrt(in), 1/sqrt(in)]).
    Weights in PyTorch's (out, in) layout; biases as (out, 1) columns."""
    params = []
    for (dout, din) in LAYER_DIMS:
        key, kw, kb = jax.random.split(key, 3)
        bound = 1.0 / (din ** 0.5)
        w = jax.random.uniform(kw, (dout, din), jnp.float32, -bound, bound)
        b = jax.random.uniform(kb, (dout, 1), jnp.float32, -bound, bound)
        params.append((w, b))
    return params


def reference_forward(x, params):
    """Plain-JAX reference with matching precision (bf16 matmul inputs, f32 accumulate)."""
    def lin(h, w, b):
        return jnp.dot(h.astype(jnp.bfloat16), w.T.astype(jnp.bfloat16),
                       preferred_element_type=jnp.float32) + b[:, 0]

    h = x.astype(jnp.float32)
    for l in range(NUM_LAYERS - 1):
        w, b = params[l]
        h = jnp.tanh(lin(h, w, b))
    w, b = params[NUM_LAYERS - 1]
    return lin(h, w, b)


if __name__ == "__main__":
    key = jax.random.PRNGKey(0)
    kx, kp = jax.random.split(key)

    batch = 600        # not a multiple of 128 -> exercises padding; small-B path -> 2 tiles
    x = jax.random.normal(kx, (batch, N_FEATURES), jnp.float32)
    params = init_params(kp)

    out = jax.block_until_ready(ae_3d_200_forward(x, params))
    ref = reference_forward(x, params)

    assert out.shape == (batch, N_FEATURES)
    assert bool(jnp.all(jnp.isfinite(out)))
    assert jnp.allclose(out, ref, atol=1e-2, rtol=1e-2), "mismatch vs. JAX reference"

    print("KERNEL_OK")
</pallas_src>

<mosaic_0001>
module attributes {stable_mosaic.version = 11 : i64} {
  func.func @ae_3d_200_kernel(%arg0: i32, %arg1: memref<4x384xf32, #tpu.memory_space<vmem>>, %arg2: memref<8x256x256xbf16, #tpu.memory_space<vmem>>, %arg3: memref<256x8xf32, #tpu.memory_space<vmem>>, %arg4: memref<4x384xf32, #tpu.memory_space<vmem>>) attributes {dimension_semantics = [#tpu.dimension_semantics<parallel>], iteration_bounds = array<i64: 2>, scalar_prefetch = 0 : i64, scratch_operands = 0 : i64, tpu.core_type = #tpu.core_type<tc>, window_params = [{transform_indices = @transform_0, window_bounds = array<i64: 4, 384>}, {pipeline_mode = #tpu.pipeline_mode<synchronous>, transform_indices = @transform_1, window_bounds = array<i64: 8, 256, 256>}, {pipeline_mode = #tpu.pipeline_mode<synchronous>, transform_indices = @transform_2, window_bounds = array<i64: 256, 8>}, {transform_indices = @transform_3, window_bounds = array<i64: 4, 384>}]} {
    %c0 = arith.constant 0 : index
    %c0_0 = arith.constant 0 : index
    %0 = vector.load %arg1[%c0, %c0_0] : memref<4x384xf32, #tpu.memory_space<vmem>>, vector<4x384xf32>
    %1 = arith.truncf %0 : vector<4x384xf32> to vector<4x384xbf16>
    %c0_1 = arith.constant 0 : index
    %c0_2 = arith.constant 0 : index
    %c0_3 = arith.constant 0 : index
    %2 = vector.load %arg2[%c0_1, %c0_2, %c0_3] : memref<8x256x256xbf16, #tpu.memory_space<vmem>>, vector<1x200x4xbf16>
    %3 = vector.shape_cast %2 : vector<1x200x4xbf16> to vector<200x4xbf16>
    %c0_4 = arith.constant 0 : index
    %c0_5 = arith.constant 0 : index
    %4 = vector.load %arg3[%c0_4, %c0_5] : memref<256x8xf32, #tpu.memory_space<vmem>>, vector<200x1xf32>
    %cst = arith.constant dense<0.000000e+00> : vector<200x384xf32>
    %5 = tpu.matmul %3, %1, %cst {dimension_numbers = #tpu.dot_dimension_numbers<[1], [0], [0], [1], [0, 0, 1, 1], [], []>} : vector<200x4xbf16>, vector<4x384xbf16>, vector<200x384xf32> -> vector<200x384xf32>
    %6 = vector.broadcast %4 : vector<200x1xf32> to vector<200x384xf32>
    %7 = arith.addf %5, %6 : vector<200x384xf32>
    %8 = math.tanh %7 : vector<200x384xf32>
    %9 = arith.truncf %8 : vector<200x384xf32> to vector<200x384xbf16>
    %c1 = arith.constant 1 : index
    %c0_6 = arith.constant 0 : index
    %c0_7 = arith.constant 0 : index
    %10 = vector.load %arg2[%c1, %c0_6, %c0_7] : memref<8x256x256xbf16, #tpu.memory_space<vmem>>, vector<1x100x200xbf16>
    %11 = vector.shape_cast %10 : vector<1x100x200xbf16> to vector<100x200xbf16>
    %c0_8 = arith.constant 0 : index
    %c1_9 = arith.constant 1 : index
    %12 = vector.load %arg3[%c0_8, %c1_9] : memref<256x8xf32, #tpu.memory_space<vmem>>, vector<100x1xf32>
    %cst_10 = arith.constant dense<0.000000e+00> : vector<100x384xf32>
    %13 = tpu.matmul %11, %9, %cst_10 {dimension_numbers = #tpu.dot_dimension_numbers<[1], [0], [0], [1], [0, 0, 1, 1], [], []>} : vector<100x200xbf16>, vector<200x384xbf16>, vector<100x384xf32> -> vector<100x384xf32>
    %14 = vector.broadcast %12 : vector<100x1xf32> to vector<100x384xf32>
    %15 = arith.addf %13, %14 : vector<100x384xf32>
    %16 = math.tanh %15 : vector<100x384xf32>
    %17 = arith.truncf %16 : vector<100x384xf32> to vector<100x384xbf16>
    %c2 = arith.constant 2 : index
    %c0_11 = arith.constant 0 : index
    %c0_12 = arith.constant 0 : index
    %18 = vector.load %arg2[%c2, %c0_11, %c0_12] : memref<8x256x256xbf16, #tpu.memory_space<vmem>>, vector<1x50x100xbf16>
    %19 = vector.shape_cast %18 : vector<1x50x100xbf16> to vector<50x100xbf16>
    %c0_13 = arith.constant 0 : index
    %c2_14 = arith.constant 2 : index
    %20 = vector.load %arg3[%c0_13, %c2_14] : memref<256x8xf32, #tpu.memory_space<vmem>>, vector<50x1xf32>
    %cst_15 = arith.constant dense<0.000000e+00> : vector<50x384xf32>
    %21 = tpu.matmul %19, %17, %cst_15 {dimension_numbers = #tpu.dot_dimension_numbers<[1], [0], [0], [1], [0, 0, 1, 1], [], []>} : vector<50x100xbf16>, vector<100x384xbf16>, vector<50x384xf32> -> vector<50x384xf32>
    %22 = vector.broadcast %20 : vector<50x1xf32> to vector<50x384xf32>
    %23 = arith.addf %21, %22 : vector<50x384xf32>
    %24 = math.tanh %23 : vector<50x384xf32>
    %25 = arith.truncf %24 : vector<50x384xf32> to vector<50x384xbf16>
    %c3 = arith.constant 3 : index
    %c0_16 = arith.constant 0 : index
    %c0_17 = arith.constant 0 : index
    %26 = vector.load %arg2[%c3, %c0_16, %c0_17] : memref<8x256x256xbf16, #tpu.memory_space<vmem>>, vector<1x3x50xbf16>
    %27 = vector.shape_cast %26 : vector<1x3x50xbf16> to vector<3x50xbf16>
    %c0_18 = arith.constant 0 : index
    %c3_19 = arith.constant 3 : index
    %28 = vector.load %arg3[%c0_18, %c3_19] : memref<256x8xf32, #tpu.memory_space<vmem>>, vector<3x1xf32>
    %cst_20 = arith.constant dense<0.000000e+00> : vector<3x384xf32>
    %29 = tpu.matmul %27, %25, %cst_20 {dimension_numbers = #tpu.dot_dimension_numbers<[1], [0], [0], [1], [0, 0, 1, 1], [], []>} : vector<3x50xbf16>, vector<50x384xbf16>, vector<3x384xf32> -> vector<3x384xf32>
    %30 = vector.broadcast %28 : vector<3x1xf32> to vector<3x384xf32>
    %31 = arith.addf %29, %30 : vector<3x384xf32>
    %32 = math.tanh %31 : vector<3x384xf32>
    %33 = arith.truncf %32 : vector<3x384xf32> to vector<3x384xbf16>
    %c4 = arith.constant 4 : index
    %c0_21 = arith.constant 0 : index
    %c0_22 = arith.constant 0 : index
    %34 = vector.load %arg2[%c4, %c0_21, %c0_22] : memref<8x256x256xbf16, #tpu.memory_space<vmem>>, vector<1x50x3xbf16>
    %35 = vector.shape_cast %34 : vector<1x50x3xbf16> to vector<50x3xbf16>
    %c0_23 = arith.constant 0 : index
    %c4_24 = arith.constant 4 : index
    %36 = vector.load %arg3[%c0_23, %c4_24] : memref<256x8xf32, #tpu.memory_space<vmem>>, vector<50x1xf32>
    %cst_25 = arith.constant dense<0.000000e+00> : vector<50x384xf32>
    %37 = tpu.matmul %35, %33, %cst_25 {dimension_numbers = #tpu.dot_dimension_numbers<[1], [0], [0], [1], [0, 0, 1, 1], [], []>} : vector<50x3xbf16>, vector<3x384xbf16>, vector<50x384xf32> -> vector<50x384xf32>
    %38 = vector.broadcast %36 : vector<50x1xf32> to vector<50x384xf32>
    %39 = arith.addf %37, %38 : vector<50x384xf32>
    %40 = math.tanh %39 : vector<50x384xf32>
    %41 = arith.truncf %40 : vector<50x384xf32> to vector<50x384xbf16>
    %c5 = arith.constant 5 : index
    %c0_26 = arith.constant 0 : index
    %c0_27 = arith.constant 0 : index
    %42 = vector.load %arg2[%c5, %c0_26, %c0_27] : memref<8x256x256xbf16, #tpu.memory_space<vmem>>, vector<1x100x50xbf16>
    %43 = vector.shape_cast %42 : vector<1x100x50xbf16> to vector<100x50xbf16>
    %c0_28 = arith.constant 0 : index
    %c5_29 = arith.constant 5 : index
    %44 = vector.load %arg3[%c0_28, %c5_29] : memref<256x8xf32, #tpu.memory_space<vmem>>, vector<100x1xf32>
    %cst_30 = arith.constant dense<0.000000e+00> : vector<100x384xf32>
    %45 = tpu.matmul %43, %41, %cst_30 {dimension_numbers = #tpu.dot_dimension_numbers<[1], [0], [0], [1], [0, 0, 1, 1], [], []>} : vector<100x50xbf16>, vector<50x384xbf16>, vector<100x384xf32> -> vector<100x384xf32>
    %46 = vector.broadcast %44 : vector<100x1xf32> to vector<100x384xf32>
    %47 = arith.addf %45, %46 : vector<100x384xf32>
    %48 = math.tanh %47 : vector<100x384xf32>
    %49 = arith.truncf %48 : vector<100x384xf32> to vector<100x384xbf16>
    %c6 = arith.constant 6 : index
    %c0_31 = arith.constant 0 : index
    %c0_32 = arith.constant 0 : index
    %50 = vector.load %arg2[%c6, %c0_31, %c0_32] : memref<8x256x256xbf16, #tpu.memory_space<vmem>>, vector<1x200x100xbf16>
    %51 = vector.shape_cast %50 : vector<1x200x100xbf16> to vector<200x100xbf16>
    %c0_33 = arith.constant 0 : index
    %c6_34 = arith.constant 6 : index
    %52 = vector.load %arg3[%c0_33, %c6_34] : memref<256x8xf32, #tpu.memory_space<vmem>>, vector<200x1xf32>
    %cst_35 = arith.constant dense<0.000000e+00> : vector<200x384xf32>
    %53 = tpu.matmul %51, %49, %cst_35 {dimension_numbers = #tpu.dot_dimension_numbers<[1], [0], [0], [1], [0, 0, 1, 1], [], []>} : vector<200x100xbf16>, vector<100x384xbf16>, vector<200x384xf32> -> vector<200x384xf32>
    %54 = vector.broadcast %52 : vector<200x1xf32> to vector<200x384xf32>
    %55 = arith.addf %53, %54 : vector<200x384xf32>
    %56 = math.tanh %55 : vector<200x384xf32>
    %57 = arith.truncf %56 : vector<200x384xf32> to vector<200x384xbf16>
    %c7 = arith.constant 7 : index
    %c0_36 = arith.constant 0 : index
    %c0_37 = arith.constant 0 : index
    %58 = vector.load %arg2[%c7, %c0_36, %c0_37] : memref<8x256x256xbf16, #tpu.memory_space<vmem>>, vector<1x4x200xbf16>
    %59 = vector.shape_cast %58 : vector<1x4x200xbf16> to vector<4x200xbf16>
    %c0_38 = arith.constant 0 : index
    %c7_39 = arith.constant 7 : index
    %60 = vector.load %arg3[%c0_38, %c7_39] : memref<256x8xf32, #tpu.memory_space<vmem>>, vector<4x1xf32>
    %cst_40 = arith.constant dense<0.000000e+00> : vector<4x384xf32>
    %61 = tpu.matmul %59, %57, %cst_40 {dimension_numbers = #tpu.dot_dimension_numbers<[1], [0], [0], [1], [0, 0, 1, 1], [], []>} : vector<4x200xbf16>, vector<200x384xbf16>, vector<4x384xf32> -> vector<4x384xf32>
    %62 = vector.broadcast %60 : vector<4x1xf32> to vector<4x384xf32>
    %63 = arith.addf %61, %62 : vector<4x384xf32>
    %c0_41 = arith.constant 0 : index
    %c0_42 = arith.constant 0 : index
    %64 = vector.load %arg4[%c0_41, %c0_42] : memref<4x384xf32, #tpu.memory_space<vmem>>, vector<4x384xf32>
    tpu.vector_store %arg4[%c0_41, %c0_42], %63 {strides = array<i32>} : memref<4x384xf32, #tpu.memory_space<vmem>>, vector<4x384xf32>,
    return
  }
  func.func @transform_0(%arg0: i32) -> (i32, i32) {
    %c0_i32 = arith.constant 0 : i32
    %c0_i32_0 = arith.constant 0 : i32
    return %c0_i32, %arg0 : i32, i32
  }
  func.func @transform_1(%arg0: i32) -> (i32, i32, i32) {
    %c0_i32 = arith.constant 0 : i32
    %c0_i32_0 = arith.constant 0 : i32
    %c0_i32_1 = arith.constant 0 : i32
    %c0_i32_2 = arith.constant 0 : i32
    return %c0_i32, %c0_i32_0, %c0_i32_1 : i32, i32, i32
  }
  func.func @transform_2(%arg0: i32) -> (i32, i32) {
    %c0_i32 = arith.constant 0 : i32
    %c0_i32_0 = arith.constant 0 : i32
    %c0_i32_1 = arith.constant 0 : i32
    return %c0_i32, %c0_i32_0 : i32, i32
  }
  func.func @transform_3(%arg0: i32) -> (i32, i32) {
    %c0_i32 = arith.constant 0 : i32
    %c0_i32_0 = arith.constant 0 : i32
    return %c0_i32, %arg0 : i32, i32
  }
}

</mosaic_0001>

<llo_original>
// kernel: tpu_custom_call.1
$region0: #{tpu_custom_call.1}
  #allocation0 [shape = 'u32[]', space=smem, size = 0x4, offset = 0x4, fixed_abs, tag = 'smem constant byte address 0x4 - core index']
  #allocation1 [shape = 'u32[144,128]{1,0:T(1,128)}', space=vmem, size = 0x12000, scoped, tag = 'internal scratch']
  %s0 = inlined_call_operand.vmem [shape: f32[4,768], index: 0, kind: input, shape index: {}]
  %s1 = inlined_call_operand.hbm [shape: bf16[8,256,256], index: 1, kind: input, shape index: {}]
  %s2 = inlined_call_operand.vmem [shape: f32[256,8], index: 2, kind: input, shape index: {}]
  %s3 = inlined_call_operand.hbm [shape: f32[4,768], index: 3, kind: output, shape index: {}]
  %s4 = sld [smem:[#allocation0]]
  $region49: #{tpu_custom_call.1} parent=0
    _
  %s6 = ssub.s32 1, %s4
  %s7 = scalar_select 0, %s6, %s4
  $region1: #{tpu_custom_call.1} parent=0
    #allocation2 [shape = 'u8[1048576]{0}', space=vmem, size = 0x100000, scoped, tag = 'input window, operand 1, single buffered']
    #allocation3 [shape = 's32[2]{0}', space=sflag, size = 0x8, scoped, tag = 'scoped memory for tpu_custom_call.1']
    #allocation4 [shape = 's32[2]{0}', space=sflag, size = 0x8, scoped, tag = 'scoped memory for tpu_custom_call.1']
    #allocation5 [shape = 'u8[12288]{0}', space=vmem, size = 0x3000, scoped, tag = 'output window, operand 0']
    %8 = vsyncpa [#allocation3], 0
    %9 = vsyncpa [#allocation4], 0
    %s10 = scalar_lea.sflag [#allocation4], 1
    %11 = vsyncpa %s10, 0
    loop: start=0, step=1, limit=4
    $region2: #{tpu_custom_call.1} parent=1 // loop_pre_header
      _
    $region3: #{tpu_custom_call.1} parent=1 // loop_header
      %s13 = sphi 0, %s17
      %p14 = scmp.ge.s32.totalorder %s13, 4
      %s23 = sphi 0, %s25
      %s26 = sphi 0, %s23
      %s27 = sphi 0, %s26
      %s43 = sphi 0, %s27
      %s47 = sphi 0, %s47
      %s49 = sphi 0, %s47
      %s50 = sphi 0, %s49
      %s64 = sphi 0, %s50
      %s68 = sphi 0, %s68
      %s70 = sphi 0, %s68
      %s71 = sphi 0, %s70
      %s85 = sphi 0, %s71
      %s91 = sphi 0, %s93
      %s94 = sphi 0, %s91
      %s95 = sphi 0, %s94
      %s111 = sphi 0, %s95
    $region4: #{tpu_custom_call.1} parent=1 // loop_header_branch
      %16 = sbr.rel (%p14) target = $region8
    $region5: #{tpu_custom_call.1} parent=1 // loop_body
      %s18 = ssub.s32 %s13, 1
      %s19 = ssub.s32 %s13, 2
      %s20 = sadd.s32 %s13, 1
      %s21 = ssub.s32 %s13, %s20
      %p22 = scmp.eq.s32.totalorder %s21, 0
      %s24 = sadd.s32 %s23, 1
      %s25 = scalar_select %p22, %s23, %s24
      %p28 = pneg %p22
      %p29 = scmp.eq.s32.totalorder %s13, 1
      %p30 = por %p28, %p29
      %p31 = scmp.ne.s32.totalorder %s23, %s26
      %p32 = scmp.eq.s32.totalorder %s13, 0
      %p33 = por %p31, %p32
      %p34 = scmp.ne.s32.totalorder %s23, %s26
      %p35 = scmp.eq.s32.totalorder %s18, 1
      %p36 = por %p34, %p35
      %p37 = scmp.ne.s32.totalorder %s26, %s27
      %p38 = scmp.eq.s32.totalorder %s18, 0
      %p39 = por %p37, %p38
      %p40 = scmp.ne.s32.totalorder %s26, %s27
      %p41 = scmp.eq.s32.totalorder %s19, 1
      %p42 = por %p40, %p41
      %p44 = scmp.ne.s32.totalorder %s27, %s43
      %p45 = scmp.eq.s32.totalorder %s19, 0
      %p46 = por %p44, %p45
      %s48 = sadd.s32 %s47, 1
      %p51 = scmp.eq.s32.totalorder %s13, 1
      %p52 = scmp.ne.s32.totalorder %s47, %s49
      %p53 = scmp.eq.s32.totalorder %s13, 0
      %p54 = por %p52, %p53
      %p55 = scmp.ne.s32.totalorder %s47, %s49
      %p56 = scmp.eq.s32.totalorder %s18, 1
      %p57 = por %p55, %p56
      %p58 = scmp.ne.s32.totalorder %s49, %s50
      %p59 = scmp.eq.s32.totalorder %s18, 0
      %p60 = por %p58, %p59
      %p61 = scmp.ne.s32.totalorder %s49, %s50
      %p62 = scmp.eq.s32.totalorder %s19, 1
      %p63 = por %p61, %p62
      %p65 = scmp.ne.s32.totalorder %s50, %s64
      %p66 = scmp.eq.s32.totalorder %s19, 0
      %p67 = por %p65, %p66
      %s69 = sadd.s32 %s68, 1
      %p72 = scmp.eq.s32.totalorder %s13, 1
      %p73 = scmp.ne.s32.totalorder %s68, %s70
      %p74 = scmp.eq.s32.totalorder %s13, 0
      %p75 = por %p73, %p74
      %p76 = scmp.ne.s32.totalorder %s68, %s70
      %p77 = scmp.eq.s32.totalorder %s18, 1
      %p78 = por %p76, %p77
      %p79 = scmp.ne.s32.totalorder %s70, %s71
      %p80 = scmp.eq.s32.totalorder %s18, 0
      %p81 = por %p79, %p80
      %p82 = scmp.ne.s32.totalorder %s70, %s71
      %p83 = scmp.eq.s32.totalorder %s19, 1
      %p84 = por %p82, %p83
      %p86 = scmp.ne.s32.totalorder %s71, %s85
      %p87 = scmp.eq.s32.totalorder %s19, 0
      %p88 = por %p86, %p87
      %s89 = ssub.s32 %s13, %s20
      %p90 = scmp.eq.s32.totalorder %s89, 0
      %s92 = sadd.s32 %s91, 1
      %s93 = scalar_select %p90, %s91, %s92
      %p96 = pneg %p90
      %p97 = scmp.eq.s32.totalorder %s13, 1
      %p98 = por %p96, %p97
      %p99 = scmp.ne.s32.totalorder %s91, %s94
      %p100 = scmp.eq.s32.totalorder %s13, 0
      %p101 = por %p99, %p100
      %p102 = scmp.ne.s32.totalorder %s91, %s94
      %p103 = scmp.eq.s32.totalorder %s18, 1
      %p104 = por %p102, %p103
      %p105 = scmp.ne.s32.totalorder %s94, %s95
      %p106 = scmp.eq.s32.totalorder %s18, 0
      %p107 = por %p105, %p106
      %p108 = scmp.ne.s32.totalorder %s94, %s95
      %p109 = scmp.eq.s32.totalorder %s19, 1
      %p110 = por %p108, %p109
      %p112 = scmp.ne.s32.totalorder %s95, %s111
      %p113 = scmp.eq.s32.totalorder %s19, 0
      %p114 = por %p112, %p113
      %p115 = scmp.le.s32.totalorder 1, %s13
      %p116 = scmp.lt.s32.totalorder %s13, 3
      %p117 = pnand %p115, %p116
      %p118 = pneg %p117
      // Predicated region
      $region9: #{tpu_custom_call.1} parent=5 // pred_check
        _
      $region10: #{tpu_custom_call.1} parent=5 // pred_check_branch
        %120 = sbr.rel (%p117) target = $region12
      $region11: #{tpu_custom_call.1} parent=5 // pred_region
        %s121 = ssub.s32 %s13, 1
        // Predicated region
        $region13: #{tpu_custom_call.1} parent=11 // pred_check
          %p122 = pneg %p60
        $region14: #{tpu_custom_call.1} parent=11 // pred_check_branch
          %124 = sbr.rel (%p122) target = $region16
        $region15: #{tpu_custom_call.1} parent=11 // pred_region
          %s126 = ssub.s32 32768, 32768
          %127 = vsyncadd [#allocation3], %s126
          %s128 = sshll.u32 [#allocation2], 4
          %s129 = int_to_ptr.vmem [resolvable:$true] %s128
          %134 = dma.hbm_to_vmem [thread:$0]  %s1, 32768, %s129, [#allocation3], 128, 128, 8
        $region16: #{tpu_custom_call.1} parent=11 // pred_fallthru
          _
        // Predicated region
        $region17: #{tpu_custom_call.1} parent=11 // pred_check
          %p135 = pneg %p81
        $region18: #{tpu_custom_call.1} parent=11 // pred_check_branch
          %137 = sbr.rel (%p135) target = $region20
        $region19: #{tpu_custom_call.1} parent=11 // pred_region
          _
        $region20: #{tpu_custom_call.1} parent=11 // pred_fallthru
          _
      $region12: #{tpu_custom_call.1} parent=5 // pred_fallthru
        _
      %p138 = scmp.lt.s32.totalorder %s13, 2
      // Predicated region
      $region21: #{tpu_custom_call.1} parent=5 // pred_check
        %p139 = pneg %p138
      $region22: #{tpu_custom_call.1} parent=5 // pred_check_branch
        %141 = sbr.rel (%p139) target = $region24
      $region23: #{tpu_custom_call.1} parent=5 // pred_region
        // Predicated region
        $region25: #{tpu_custom_call.1} parent=23 // pred_check
          %p142 = pneg %p33
        $region26: #{tpu_custom_call.1} parent=23 // pred_check_branch
          %144 = sbr.rel (%p142) target = $region28
        $region27: #{tpu_custom_call.1} parent=23 // pred_region
          %s145 = smul.u32 3, %s13
          %p146 = scmp.lt.s32.totalorder %s145, 5
          %s147 = scalar_select %p146, %s145, 5
          %s148 = smul.addr %s147, 4
          %s149 = scalar_lea.vmem %s0, %s148
          %s150 = smul.u32 3, %s13
        $region28: #{tpu_custom_call.1} parent=23 // pred_fallthru
          _
      $region24: #{tpu_custom_call.1} parent=5 // pred_fallthru
        _
      %p151 = scmp.le.s32.totalorder 1, %s13
      %p152 = scmp.lt.s32.totalorder %s13, 3
      %p153 = pnand %p151, %p152
      %p154 = pneg %p153
      // Predicated region
      $region29: #{tpu_custom_call.1} parent=5 // pred_check
        _
      $region30: #{tpu_custom_call.1} parent=5 // pred_check_branch
        %156 = sbr.rel (%p153) target = $region32
      $region31: #{tpu_custom_call.1} parent=5 // pred_region
        %s157 = ssub.s32 %s13, 1
        // Predicated region
        $region33: #{tpu_custom_call.1} parent=31 // pred_check
          %p158 = pneg %p60
        $region34: #{tpu_custom_call.1} parent=31 // pred_check_branch
          %160 = sbr.rel (%p158) target = $region36
        $region35: #{tpu_custom_call.1} parent=31 // pred_region
          %161 = dma.done [#allocation3], 32768
        $region36: #{tpu_custom_call.1} parent=31 // pred_fallthru
          _
        %s162 = smul.u32 3, %s18
        %p163 = scmp.lt.s32.totalorder %s162, 5
        %s164 = scalar_select %p163, %s162, 5
        %s165 = smul.addr %s164, 4
        %s166 = scalar_lea.vmem %s0, %s165
        %p167 = pneg %p39
        %p168 = pneg %p36
        %p169 = pneg %p60
        %p170 = pneg %p57
        %p171 = pneg %p81
        %p172 = pneg %p78
        %p173 = pneg %p107
        %p174 = pneg %p104
        %s175 = sand.u32 %s94, 1
        %s176 = scalar_lea.sflag [#allocation4], %s175
        %s177 = sand.u32 %s94, 1
        %s178 = smul.addr %s177, 12
        %s179 = scalar_lea.vmem [#allocation5], %s178
        %s180 = smul.u32 3, %s18
        %p181 = scmp.lt.s32.totalorder %s180, 5
        %s182 = scalar_select %p181, %s180, 5
        %s183 = smul.addr %s182, 4
        %s184 = scalar_lea.vmem %s0, %s183
        %s185 = smul.u32 3, %s18
        %s186 = smul.u32 3, %s18
        %v188 = vld [vmem:[%s184] sm:$0xff]
        %v189 = vld [vmem:[%s184 + $0x8] sm:$0xf]
        %v191 = vcombine.high %v188, %v188
        %v193 = vpack.c.bf16 %v188, %v188
        %v194 = vpack.c.bf16 %v191, %v191
        %v195 = vpack.c.bf16 %v189, %v189
        %v196 = vld [vmem:[#allocation2] sm:$0xf]
        %v197 = vld [vmem:[#allocation2 + $0x8] sm:$0xf]
        %v198 = vld [vmem:[#allocation2 + $0x10] sm:$0xf]
        %v199 = vld [vmem:[#allocation2 + $0x18] sm:$0xf]
        %v200 = vld [vmem:[#allocation2 + $0x20] sm:$0xf]
        %v201 = vld [vmem:[#allocation2 + $0x28] sm:$0xf]
        %v202 = vld [vmem:[#allocation2 + $0x30] sm:$0xf]
        %v203 = vld [vmem:[#allocation2 + $0x38] sm:$0xf]
        %v204 = vld [vmem:[#allocation2 + $0x40] sm:$0xf]
        %v205 = vld [vmem:[#allocation2 + $0x48] sm:$0xf]
        %v206 = vld [vmem:[#allocation2 + $0x50] sm:$0xf]
        %v207 = vld [vmem:[#allocation2 + $0x58] sm:$0xf]
        %v208 = vld [vmem:[#allocation2 + $0x60] sm:$0xf]
        %v209 = vld [vmem:[#allocation2 + $0x68] sm:$0xf]
        %v210 = vld [vmem:[#allocation2 + $0x70] sm:$0xf]
        %v211 = vld [vmem:[#allocation2 + $0x78] sm:$0xf]
        %v212 = vld [vmem:[#allocation2 + $0x80] sm:$0xf]
        %v213 = vld [vmem:[#allocation2 + $0x88] sm:$0xf]
        %v214 = vld [vmem:[#allocation2 + $0x90] sm:$0xf]
        %v215 = vld [vmem:[#allocation2 + $0x98] sm:$0xf]
        %v216 = vld [vmem:[#allocation2 + $0xa0] sm:$0xf]
        %v217 = vld [vmem:[#allocation2 + $0xa8] sm:$0xf]
        %v218 = vld [vmem:[#allocation2 + $0xb0] sm:$0xf]
        %v219 = vld [vmem:[#allocation2 + $0xb8] sm:$0xf]
        %v220 = vld [vmem:[#allocation2 + $0xc0] sm:$0xf]
        %v221 = vld [vmem:[%s2] sm:$0xff]
        %v222 = vld [vmem:[%s2 + $0x8] sm:$0xff]
        %v223 = vld [vmem:[%s2 + $0x10] sm:$0xff]
        %v224 = vld [vmem:[%s2 + $0x18] sm:$0xff]
        %v225 = vld [vmem:[%s2 + $0x20] sm:$0xff]
        %v226 = vld [vmem:[%s2 + $0x28] sm:$0xff]
        %v227 = vld [vmem:[%s2 + $0x30] sm:$0xff]
        %v228 = vld [vmem:[%s2 + $0x38] sm:$0xff]
        %v229 = vld [vmem:[%s2 + $0x40] sm:$0xff]
        %v230 = vld [vmem:[%s2 + $0x48] sm:$0xff]
        %v231 = vld [vmem:[%s2 + $0x50] sm:$0xff]
        %v232 = vld [vmem:[%s2 + $0x58] sm:$0xff]
        %v233 = vld [vmem:[%s2 + $0x60] sm:$0xff]
        %v234 = vld [vmem:[%s2 + $0x68] sm:$0xff]
        %v235 = vld [vmem:[%s2 + $0x70] sm:$0xff]
        %v236 = vld [vmem:[%s2 + $0x78] sm:$0xff]
        %v237 = vld [vmem:[%s2 + $0x80] sm:$0xff]
        %v238 = vld [vmem:[%s2 + $0x88] sm:$0xff]
        %v239 = vld [vmem:[%s2 + $0x90] sm:$0xff]
        %v240 = vld [vmem:[%s2 + $0x98] sm:$0xff]
        %v241 = vld [vmem:[%s2 + $0xa0] sm:$0xff]
        %v242 = vld [vmem:[%s2 + $0xa8] sm:$0xff]
        %v243 = vld [vmem:[%s2 + $0xb0] sm:$0xff]
        %v244 = vld [vmem:[%s2 + $0xb8] sm:$0xff]
        %v245 = vld [vmem:[%s2 + $0xc0] sm:$0xff]
        %247 = vset.pattern.permute.xlu0 0
        %248 = vperm.xlu0 %247, %v221
        %v249 = vpop.permute.xlu0 %248
        %252 = vset.pattern.permute.xlu0 0
        %253 = vperm.xlu0 %252, %v222
        %v254 = vpop.permute.xlu0 %253
        %257 = vset.pattern.permute.xlu0 0
        %258 = vperm.xlu0 %257, %v223
        %v259 = vpop.permute.xlu0 %258
        %262 = vset.pattern.permute.xlu0 0
        %263 = vperm.xlu0 %262, %v224
        %v264 = vpop.permute.xlu0 %263
        %267 = vset.pattern.permute.xlu0 0
        %268 = vperm.xlu0 %267, %v225
        %v269 = vpop.permute.xlu0 %268
        %272 = vset.pattern.permute.xlu0 0
        %273 = vperm.xlu0 %272, %v226
        %v274 = vpop.permute.xlu0 %273
        %277 = vset.pattern.permute.xlu0 0
        %278 = vperm.xlu0 %277, %v227
        %v279 = vpop.permute.xlu0 %278
        %282 = vset.pattern.permute.xlu0 0
        %283 = vperm.xlu0 %282, %v228
        %v284 = vpop.permute.xlu0 %283
        %287 = vset.pattern.permute.xlu0 0
        %288 = vperm.xlu0 %287, %v229
        %v289 = vpop.permute.xlu0 %288
        %292 = vset.pattern.permute.xlu0 0
        %293 = vperm.xlu0 %292, %v230
        %v294 = vpop.permute.xlu0 %293
        %297 = vset.pattern.permute.xlu0 0
        %298 = vperm.xlu0 %297, %v231
        %v299 = vpop.permute.xlu0 %298
        %302 = vset.pattern.permute.xlu0 0
        %303 = vperm.xlu0 %302, %v232
        %v304 = vpop.permute.xlu0 %303
        %307 = vset.pattern.permute.xlu0 0
        %308 = vperm.xlu0 %307, %v233
        %v309 = vpop.permute.xlu0 %308
        %312 = vset.pattern.permute.xlu0 0
        %313 = vperm.xlu0 %312, %v234
        %v314 = vpop.permute.xlu0 %313
        %317 = vset.pattern.permute.xlu0 0
        %318 = vperm.xlu0 %317, %v235
        %v319 = vpop.permute.xlu0 %318
        %322 = vset.pattern.permute.xlu0 0
        %323 = vperm.xlu0 %322, %v236
        %v324 = vpop.permute.xlu0 %323
        %327 = vset.pattern.permute.xlu0 0
        %328 = vperm.xlu0 %327, %v237
        %v329 = vpop.permute.xlu0 %328
        %332 = vset.pattern.permute.xlu0 0
        %333 = vperm.xlu0 %332, %v238
        %v334 = vpop.permute.xlu0 %333
        %337 = vset.pattern.permute.xlu0 0
        %338 = vperm.xlu0 %337, %v239
        %v339 = vpop.permute.xlu0 %338
        %342 = vset.pattern.permute.xlu0 0
        %343 = vperm.xlu0 %342, %v240
        %v344 = vpop.permute.xlu0 %343
        %347 = vset.pattern.permute.xlu0 0
        %348 = vperm.xlu0 %347, %v241
        %v349 = vpop.permute.xlu0 %348
        %352 = vset.pattern.permute.xlu0 0
        %353 = vperm.xlu0 %352, %v242
        %v354 = vpop.permute.xlu0 %353
        %357 = vset.pattern.permute.xlu0 0
        %358 = vperm.xlu0 %357, %v243
        %v359 = vpop.permute.xlu0 %358
        %362 = vset.pattern.permute.xlu0 0
        %363 = vperm.xlu0 %362, %v244
        %v364 = vpop.permute.xlu0 %363
        %367 = vset.pattern.permute.xlu0 0
        %368 = vperm.xlu0 %367, %v245
        %v369 = vpop.permute.xlu0 %368
        %v396 = vunpack.c.l.b16 %v196
        %v397 = vunpack.c.l.b16 %v197
        %v398 = vunpack.c.l.b16 %v198
        %v399 = vunpack.c.l.b16 %v199
        %v400 = vunpack.c.l.b16 %v200
        %v401 = vunpack.c.l.b16 %v201
        %v402 = vunpack.c.l.b16 %v202
        %v403 = vunpack.c.l.b16 %v203
        %v404 = vunpack.c.l.b16 %v204
        %v405 = vunpack.c.l.b16 %v205
        %v406 = vunpack.c.l.b16 %v206
        %v407 = vunpack.c.l.b16 %v207
        %v408 = vunpack.c.l.b16 %v208
        %v409 = vunpack.c.l.b16 %v209
        %v410 = vunpack.c.l.b16 %v210
        %v411 = vunpack.c.l.b16 %v211
        %v412 = vunpack.c.l.b16 %v212
        %v413 = vunpack.c.l.b16 %v213
        %v414 = vunpack.c.l.b16 %v214
        %v415 = vunpack.c.l.b16 %v215
        %v416 = vunpack.c.l.b16 %v216
        %v417 = vunpack.c.l.b16 %v217
        %v418 = vunpack.c.l.b16 %v218
        %v419 = vunpack.c.l.b16 %v219
        %v420 = vunpack.c.l.b16 %v220
        %v421 = vpack.c.b16 %v397, %v396
        %v422 = vpack.c.b16 %v399, %v398
        %v423 = vpack.c.b16 %v401, %v400
        %v424 = vpack.c.b16 %v403, %v402
        %v425 = vpack.c.b16 %v405, %v404
        %v426 = vpack.c.b16 %v407, %v406
        %v427 = vpack.c.b16 %v409, %v408
        %v428 = vpack.c.b16 %v411, %v410
        %v429 = vpack.c.b16 %v413, %v412
        %v430 = vpack.c.b16 %v415, %v414
        %v431 = vpack.c.b16 %v417, %v416
        %v432 = vpack.c.b16 %v419, %v418
        %v433 = vpack.c.b16 %v420, %v420
        %vm434 = vcmask 31744
        %v436 = vsel %vm434, %v421, 0
        %v439 = vsel %vm434, %v422, 0
        %v442 = vsel %vm434, %v423, 0
        %v445 = vsel %vm434, %v424, 0
        %v448 = vsel %vm434, %v425, 0
        %v451 = vsel %vm434, %v426, 0
        %v454 = vsel %vm434, %v427, 0
        %v457 = vsel %vm434, %v428, 0
        %v460 = vsel %vm434, %v429, 0
        %v463 = vsel %vm434, %v430, 0
        %v466 = vsel %vm434, %v431, 0
        %v469 = vsel %vm434, %v432, 0
        %v472 = vsel %vm434, %v433, 0
        %vm474 = vcmask 1041408
        %v476 = vsel %vm474, %v193, 0
        %v479 = vsel %vm474, %v194, 0
        %v482 = vsel %vm474, %v195, 0
        %484 = vmatprep.subr.bf16.mxu0 0
        %485 = vmatpush1.bf16.msra.mxu0 0
        %486 = vmatprep.subr.bf16.mxu0 0
        %487 = vmatpush1.bf16.msra.mxu0 0
        %488 = vmatprep.subr.bf16.mxu0 0
        %489 = vmatpush1.bf16.msra.mxu0 0
        %490 = vmatprep.subr.bf16.mxu0 0
        %491 = vmatpush1.bf16.msra.mxu0 0
        %492 = vmatprep.subr.bf16.mxu0 0
        %493 = vmatpush1.bf16.msra.mxu0 0
        %494 = vmatprep.subr.bf16.mxu0 0
        %495 = vmatpush1.bf16.msra.mxu0 0
        %496 = vmatprep.subr.bf16.mxu0 0
        %497 = vmatpush1.bf16.msra.mxu0 0
        %498 = vmatprep.subr.bf16.mxu0 %v479
        %499 = vmatpush1.bf16.msra.mxu0 %v476
        %500 = vmatprep.subr.bf16.mxu0 0
        %501 = vmatpush2.bf16.msra.mxu0 0
        %502 = vmatprep.subr.bf16.mxu0 0
        %503 = vmatpush2.bf16.msra.mxu0 0
        %504 = vmatprep.subr.bf16.mxu0 0
        %505 = vmatpush2.bf16.msra.mxu0 0
        %506 = vmatprep.subr.bf16.mxu0 0
        %507 = vmatpush2.bf16.msra.mxu0 0
        %508 = vmatprep.subr.bf16.mxu0 0
        %509 = vmatpush2.bf16.msra.mxu0 0
        %510 = vmatprep.subr.bf16.mxu0 0
        %511 = vmatpush2.bf16.msra.mxu0 0
        %512 = vmatprep.subr.bf16.mxu0 0
        %513 = vmatpush2.bf16.msra.mxu0 0
        %514 = vmatprep.subr.bf16.mxu0 0
        %515 = vmatpush2.bf16.msra.mxu0 0
        %516 = vmatprep.mubr.bf16.mxu0 0
        %517 = vmatmul.mubr.bf16.gmra.mxu0 %v436
        %v518 = vpop.f32.mrf.mxu0
        %v519 = vadd.f32 %v249, %v518
        %v520 = vpop.f32.mrf.mxu0
        %v521 = vadd.f32 %v249, %v520
        %v522 = vpop.f32.mrf.mxu0
        %v523 = vadd.f32 %v254, %v522
        %v524 = vpop.f32.mrf.mxu0
        %v525 = vadd.f32 %v254, %v524
        %526 = vmatprep.mubr.bf16.mxu0 0
        %527 = vmatmul.mubr.bf16.gmra.mxu0 %v439
        %v528 = vpop.f32.mrf.mxu0
        %v529 = vadd.f32 %v259, %v528
        %v530 = vpop.f32.mrf.mxu0
        %v531 = vadd.f32 %v259, %v530
        %v532 = vpop.f32.mrf.mxu0
        %v533 = vadd.f32 %v264, %v532
        %v534 = vpop.f32.mrf.mxu0
        %v535 = vadd.f32 %v264, %v534
        %536 = vmatprep.mubr.bf16.mxu0 0
        %537 = vmatmul.mubr.bf16.gmra.mxu0 %v442
        %v538 = vpop.f32.mrf.mxu0
        %v539 = vadd.f32 %v269, %v538
        %v540 = vpop.f32.mrf.mxu0
        %v541 = vadd.f32 %v269, %v540
        %v542 = vpop.f32.mrf.mxu0
        %v543 = vadd.f32 %v274, %v542
        %v544 = vpop.f32.mrf.mxu0
        %v545 = vadd.f32 %v274, %v544
        %546 = vmatprep.mubr.bf16.mxu0 0
        %547 = vmatmul.mubr.bf16.gmra.mxu0 %v445
        %v548 = vpop.f32.mrf.mxu0
        %v549 = vadd.f32 %v279, %v548
        %v550 = vpop.f32.mrf.mxu0
        %v551 = vadd.f32 %v279, %v550
        %v552 = vpop.f32.mrf.mxu0
        %v553 = vadd.f32 %v284, %v552
        %v554 = vpop.f32.mrf.mxu0
        %v555 = vadd.f32 %v284, %v554
        %556 = vmatprep.mubr.bf16.mxu0 0
        %557 = vmatmul.mubr.bf16.gmra.mxu0 %v448
        %v558 = vpop.f32.mrf.mxu0
        %v559 = vadd.f32 %v289, %v558
        %v560 = vpop.f32.mrf.mxu0
        %v561 = vadd.f32 %v289, %v560
        %v562 = vpop.f32.mrf.mxu0
        %v563 = vadd.f32 %v294, %v562
        %v564 = vpop.f32.mrf.mxu0
        %v565 = vadd.f32 %v294, %v564
        %566 = vmatprep.mubr.bf16.mxu0 0
        %567 = vmatmul.mubr.bf16.gmra.mxu0 %v451
        %v568 = vpop.f32.mrf.mxu0
        %v569 = vadd.f32 %v299, %v568
        %v570 = vpop.f32.mrf.mxu0
        %v571 = vadd.f32 %v299, %v570
        %v572 = vpop.f32.mrf.mxu0
        %v573 = vadd.f32 %v304, %v572
        %v574 = vpop.f32.mrf.mxu0
        %v575 = vadd.f32 %v304, %v574
        %576 = vmatprep.mubr.bf16.mxu0 0
        %577 = vmatmul.mubr.bf16.gmra.mxu0 %v454
        %v578 = vpop.f32.mrf.mxu0
        %v579 = vadd.f32 %v309, %v578
        %v580 = vpop.f32.mrf.mxu0
        %v581 = vadd.f32 %v309, %v580
        %v582 = vpop.f32.mrf.mxu0
        %v583 = vadd.f32 %v314, %v582
        %v584 = vpop.f32.mrf.mxu0
        %v585 = vadd.f32 %v314, %v584
        %586 = vmatprep.mubr.bf16.mxu0 0
        %587 = vmatmul.mubr.bf16.gmra.mxu0 %v457
        %v588 = vpop.f32.mrf.mxu0
        %v589 = vadd.f32 %v319, %v588
        %v590 = vpop.f32.mrf.mxu0
        %v591 = vadd.f32 %v319, %v590
        %v592 = vpop.f32.mrf.mxu0
        %v593 = vadd.f32 %v324, %v592
        %v594 = vpop.f32.mrf.mxu0
        %v595 = vadd.f32 %v324, %v594
        %596 = vmatprep.mubr.bf16.mxu0 0
        %597 = vmatmul.mubr.bf16.gmra.mxu0 %v460
        %v598 = vpop.f32.mrf.mxu0
        %v599 = vadd.f32 %v329, %v598
        %v600 = vpop.f32.mrf.mxu0
        %v601 = vadd.f32 %v329, %v600
        %v602 = vpop.f32.mrf.mxu0
        %v603 = vadd.f32 %v334, %v602
        %v604 = vpop.f32.mrf.mxu0
        %v605 = vadd.f32 %v334, %v604
        %606 = vmatprep.mubr.bf16.mxu0 0
        %607 = vmatmul.mubr.bf16.gmra.mxu0 %v463
        %v608 = vpop.f32.mrf.mxu0
        %v609 = vadd.f32 %v339, %v608
        %v610 = vpop.f32.mrf.mxu0
        %v611 = vadd.f32 %v339, %v610
        %v612 = vpop.f32.mrf.mxu0
        %v613 = vadd.f32 %v344, %v612
        %v614 = vpop.f32.mrf.mxu0
        %v615 = vadd.f32 %v344, %v614
        %616 = vmatprep.mubr.bf16.mxu0 0
        %617 = vmatmul.mubr.bf16.gmra.mxu0 %v466
        %v618 = vpop.f32.mrf.mxu0
        %v619 = vadd.f32 %v349, %v618
        %v620 = vpop.f32.mrf.mxu0
        %v621 = vadd.f32 %v349, %v620
        %v622 = vpop.f32.mrf.mxu0
        %v623 = vadd.f32 %v354, %v622
        %v624 = vpop.f32.mrf.mxu0
        %v625 = vadd.f32 %v354, %v624
        %626 = vmatprep.mubr.bf16.mxu0 0
        %627 = vmatmul.mubr.bf16.gmra.mxu0 %v469
        %v628 = vpop.f32.mrf.mxu0
        %v629 = vadd.f32 %v359, %v628
        %v630 = vpop.f32.mrf.mxu0
        %v631 = vadd.f32 %v359, %v630
        %v632 = vpop.f32.mrf.mxu0
        %v633 = vadd.f32 %v364, %v632
        %v634 = vpop.f32.mrf.mxu0
        %v635 = vadd.f32 %v364, %v634
        %636 = vmatprep.mubr.bf16.mxu0 0
        %637 = vmatmul.mubr.bf16.gmra.mxu0 %v472
        %v638 = vpop.f32.mrf.mxu0
        %v639 = vadd.f32 %v369, %v638
        %v640 = vpop.f32.mrf.mxu0
        %v641 = vadd.f32 %v369, %v640
        %v642 = vpop.f32.mrf.mxu0
        %v643 = vpop.f32.mrf.mxu0
        %644 = vdwg.mxu0
        %645 = vmatprep.subr.bf16.mxu0 0
        %646 = vmatpush1.bf16.msra.mxu0 0
        %647 = vmatprep.subr.bf16.mxu0 0
        %648 = vmatpush1.bf16.msra.mxu0 0
        %649 = vmatprep.subr.bf16.mxu0 0
        %650 = vmatpush1.bf16.msra.mxu0 0
        %651 = vmatprep.subr.bf16.mxu0 0
        %652 = vmatpush1.bf16.msra.mxu0 0
        %653 = vmatprep.subr.bf16.mxu0 0
        %654 = vmatpush1.bf16.msra.mxu0 0
        %655 = vmatprep.subr.bf16.mxu0 0
        %656 = vmatpush1.bf16.msra.mxu0 0
        %657 = vmatprep.subr.bf16.mxu0 0
        %658 = vmatpush1.bf16.msra.mxu0 0
        %659 = vmatprep.subr.bf16.mxu0 0
        %660 = vmatpush1.bf16.msra.mxu0 %v482
        %661 = vmatprep.subr.bf16.mxu0 0
        %662 = vmatpush2.bf16.msra.mxu0 0
        %663 = vmatprep.subr.bf16.mxu0 0
        %664 = vmatpush2.bf16.msra.mxu0 0
        %665 = vmatprep.subr.bf16.mxu0 0
        %666 = vmatpush2.bf16.msra.mxu0 0
        %667 = vmatprep.subr.bf16.mxu0 0
        %668 = vmatpush2.bf16.msra.mxu0 0
        %669 = vmatprep.subr.bf16.mxu0 0
        %670 = vmatpush2.bf16.msra.mxu0 0
        %671 = vmatprep.subr.bf16.mxu0 0
        %672 = vmatpush2.bf16.msra.mxu0 0
        %673 = vmatprep.subr.bf16.mxu0 0
        %674 = vmatpush2.bf16.msra.mxu0 0
        %675 = vmatprep.subr.bf16.mxu0 0
        %676 = vmatpush2.bf16.msra.mxu0 0
        %677 = vmatprep.mubr.bf16.mxu0 0
        %678 = vmatmul.mubr.bf16.gmra.mxu0 %v436
        %v679 = vpop.f32.mrf.mxu0
        %v680 = vadd.f32 %v249, %v679
        %v681 = vpop.f32.mrf.mxu0
        %v682 = vpop.f32.mrf.mxu0
        %v683 = vadd.f32 %v254, %v682
        %v684 = vpop.f32.mrf.mxu0
        %685 = vmatprep.mubr.bf16.mxu0 0
        %686 = vmatmul.mubr.bf16.gmra.mxu0 %v439
        %v687 = vpop.f32.mrf.mxu0
        %v688 = vadd.f32 %v259, %v687
        %v689 = vpop.f32.mrf.mxu0
        %v690 = vpop.f32.mrf.mxu0
        %v691 = vadd.f32 %v264, %v690
        %v692 = vpop.f32.mrf.mxu0
        %693 = vmatprep.mubr.bf16.mxu0 0
        %694 = vmatmul.mubr.bf16.gmra.mxu0 %v442
        %v695 = vpop.f32.mrf.mxu0
        %v696 = vadd.f32 %v269, %v695
        %v697 = vpop.f32.mrf.mxu0
        %v698 = vpop.f32.mrf.mxu0
        %v699 = vadd.f32 %v274, %v698
        %v700 = vpop.f32.mrf.mxu0
        %701 = vmatprep.mubr.bf16.mxu0 0
        %702 = vmatmul.mubr.bf16.gmra.mxu0 %v445
        %v703 = vpop.f32.mrf.mxu0
        %v704 = vadd.f32 %v279, %v703
        %v705 = vpop.f32.mrf.mxu0
        %v706 = vpop.f32.mrf.mxu0
        %v707 = vadd.f32 %v284, %v706
        %v708 = vpop.f32.mrf.mxu0
        %709 = vmatprep.mubr.bf16.mxu0 0
        %710 = vmatmul.mubr.bf16.gmra.mxu0 %v448
        %v711 = vpop.f32.mrf.mxu0
        %v712 = vadd.f32 %v289, %v711
        %v713 = vpop.f32.mrf.mxu0
        %v714 = vpop.f32.mrf.mxu0
        %v715 = vadd.f32 %v294, %v714
        %v716 = vpop.f32.mrf.mxu0
        %717 = vmatprep.mubr.bf16.mxu0 0
        %718 = vmatmul.mubr.bf16.gmra.mxu0 %v451
        %v719 = vpop.f32.mrf.mxu0
        %v720 = vadd.f32 %v299, %v719
        %v721 = vpop.f32.mrf.mxu0
        %v722 = vpop.f32.mrf.mxu0
        %v723 = vadd.f32 %v304, %v722
        %v724 = vpop.f32.mrf.mxu0
        %725 = vmatprep.mubr.bf16.mxu0 0
        %726 = vmatmul.mubr.bf16.gmra.mxu0 %v454
        %v727 = vpop.f32.mrf.mxu0
        %v728 = vadd.f32 %v309, %v727
        %v729 = vpop.f32.mrf.mxu0
        %v730 = vpop.f32.mrf.mxu0
        %v731 = vadd.f32 %v314, %v730
        %v732 = vpop.f32.mrf.mxu0
        %733 = vmatprep.mubr.bf16.mxu0 0
        %734 = vmatmul.mubr.bf16.gmra.mxu0 %v457
        %v735 = vpop.f32.mrf.mxu0
        %v736 = vadd.f32 %v319, %v735
        %v737 = vpop.f32.mrf.mxu0
        %v738 = vpop.f32.mrf.mxu0
        %v739 = vadd.f32 %v324, %v738
        %v740 = vpop.f32.mrf.mxu0
        %741 = vmatprep.mubr.bf16.mxu0 0
        %742 = vmatmul.mubr.bf16.gmra.mxu0 %v460
        %v743 = vpop.f32.mrf.mxu0
        %v744 = vadd.f32 %v329, %v743
        %v745 = vpop.f32.mrf.mxu0
        %v746 = vpop.f32.mrf.mxu0
        %v747 = vadd.f32 %v334, %v746
        %v748 = vpop.f32.mrf.mxu0
        %749 = vmatprep.mubr.bf16.mxu0 0
        %750 = vmatmul.mubr.bf16.gmra.mxu0 %v463
        %v751 = vpop.f32.mrf.mxu0
        %v752 = vadd.f32 %v339, %v751
        %v753 = vpop.f32.mrf.mxu0
        %v754 = vpop.f32.mrf.mxu0
        %v755 = vadd.f32 %v344, %v754
        %v756 = vpop.f32.mrf.mxu0
        %757 = vmatprep.mubr.bf16.mxu0 0
        %758 = vmatmul.mubr.bf16.gmra.mxu0 %v466
        %v759 = vpop.f32.mrf.mxu0
        %v760 = vadd.f32 %v349, %v759
        %v761 = vpop.f32.mrf.mxu0
        %v762 = vpop.f32.mrf.mxu0
        %v763 = vadd.f32 %v354, %v762
        %v764 = vpop.f32.mrf.mxu0
        %765 = vmatprep.mubr.bf16.mxu0 0
        %766 = vmatmul.mubr.bf16.gmra.mxu0 %v469
        %v767 = vpop.f32.mrf.mxu0
        %v768 = vadd.f32 %v359, %v767
        %v769 = vpop.f32.mrf.mxu0
        %v770 = vpop.f32.mrf.mxu0
        %v771 = vadd.f32 %v364, %v770
        %v772 = vpop.f32.mrf.mxu0
        %773 = vmatprep.mubr.bf16.mxu0 0
        %774 = vmatmul.mubr.bf16.gmra.mxu0 %v472
        %v775 = vpop.f32.mrf.mxu0
        %v776 = vadd.f32 %v369, %v775
        %v777 = vpop.f32.mrf.mxu0
        %v778 = vpop.f32.mrf.mxu0
        %v779 = vpop.f32.mrf.mxu0
        %780 = vdwg.mxu0
        %v781 = vtanh.pop %v519
        %v782 = vtanh.pop %v521
        %v783 = vtanh.pop %v680
        %v784 = vtanh.pop %v523
        %v785 = vtanh.pop %v525
        %v786 = vtanh.pop %v683
        %v787 = vtanh.pop %v529
        %v788 = vtanh.pop %v531
        %v789 = vtanh.pop %v688
        %v790 = vtanh.pop %v533
        %v791 = vtanh.pop %v535
        %v792 = vtanh.pop %v691
        %v793 = vtanh.pop %v539
        %v794 = vtanh.pop %v541
        %v795 = vtanh.pop %v696
        %v796 = vtanh.pop %v543
        %v797 = vtanh.pop %v545
        %v798 = vtanh.pop %v699
        %v799 = vtanh.pop %v549
        %v800 = vtanh.pop %v551
        %v801 = vtanh.pop %v704
        %v802 = vtanh.pop %v553
        %v803 = vtanh.pop %v555
        %v804 = vtanh.pop %v707
        %v805 = vtanh.pop %v559
        %v806 = vtanh.pop %v561
        %v807 = vtanh.pop %v712
        %v808 = vtanh.pop %v563
        %v809 = vtanh.pop %v565
        %v810 = vtanh.pop %v715
        %v811 = vtanh.pop %v569
        %v812 = vtanh.pop %v571
        %v813 = vtanh.pop %v720
        %v814 = vtanh.pop %v573
        %v815 = vtanh.pop %v575
        %v816 = vtanh.pop %v723
        %v817 = vtanh.pop %v579
        %v818 = vtanh.pop %v581
        %v819 = vtanh.pop %v728
        %v820 = vtanh.pop %v583
        %v821 = vtanh.pop %v585
        %v822 = vtanh.pop %v731
        %v823 = vtanh.pop %v589
        %v824 = vtanh.pop %v591
        %v825 = vtanh.pop %v736
        %v826 = vtanh.pop %v593
        %v827 = vtanh.pop %v595
        %v828 = vtanh.pop %v739
        %v829 = vtanh.pop %v599
        %v830 = vtanh.pop %v601
        %v831 = vtanh.pop %v744
        %v832 = vtanh.pop %v603
        %v833 = vtanh.pop %v605
        %v834 = vtanh.pop %v747
        %v835 = vtanh.pop %v609
        %v836 = vtanh.pop %v611
        %v837 = vtanh.pop %v752
        %v838 = vtanh.pop %v613
        %v839 = vtanh.pop %v615
        %v840 = vtanh.pop %v755
        %v841 = vtanh.pop %v619
        %v842 = vtanh.pop %v621
        %v843 = vtanh.pop %v760
        %v844 = vtanh.pop %v623
        %v845 = vtanh.pop %v625
        %v846 = vtanh.pop %v763
        %v847 = vtanh.pop %v629
        %v848 = vtanh.pop %v631
        %v849 = vtanh.pop %v768
        %v850 = vtanh.pop %v633
        %v851 = vtanh.pop %v635
        %v852 = vtanh.pop %v771
        %v853 = vtanh.pop %v639
        %v854 = vtanh.pop %v641
        %v855 = vtanh.pop %v776
        %v856 = vpack.c.bf16 %v784, %v781
        %v857 = vpack.c.bf16 %v785, %v782
        %v858 = vpack.c.bf16 %v786, %v783
        %v859 = vpack.c.bf16 %v790, %v787
        %v860 = vpack.c.bf16 %v791, %v788
        %v861 = vpack.c.bf16 %v792, %v789
        %v862 = vpack.c.bf16 %v796, %v793
        %v863 = vpack.c.bf16 %v797, %v794
        %v864 = vpack.c.bf16 %v798, %v795
        %v865 = vpack.c.bf16 %v802, %v799
        %v866 = vpack.c.bf16 %v803, %v800
        %v867 = vpack.c.bf16 %v804, %v801
        %v868 = vpack.c.bf16 %v808, %v805
        %v869 = vpack.c.bf16 %v809, %v806
        %v870 = vpack.c.bf16 %v810, %v807
        %v871 = vpack.c.bf16 %v814, %v811
        %v872 = vpack.c.bf16 %v815, %v812
        %v873 = vpack.c.bf16 %v816, %v813
        %v874 = vpack.c.bf16 %v820, %v817
        %v875 = vpack.c.bf16 %v821, %v818
        %v876 = vpack.c.bf16 %v822, %v819
        %v877 = vpack.c.bf16 %v826, %v823
        %v878 = vpack.c.bf16 %v827, %v824
        %v879 = vpack.c.bf16 %v828, %v825
        %v880 = vpack.c.bf16 %v832, %v829
        %v881 = vpack.c.bf16 %v833, %v830
        %v882 = vpack.c.bf16 %v834, %v831
        %v883 = vpack.c.bf16 %v838, %v835
        %v884 = vpack.c.bf16 %v839, %v836
        %v885 = vpack.c.bf16 %v840, %v837
        %v886 = vpack.c.bf16 %v844, %v841
        %v887 = vpack.c.bf16 %v845, %v842
        %v888 = vpack.c.bf16 %v846, %v843
        %v889 = vpack.c.bf16 %v850, %v847
        %v890 = vpack.c.bf16 %v851, %v848
        %v891 = vpack.c.bf16 %v852, %v849
        %v892 = vpack.c.bf16 %v853, %v853
        %v893 = vpack.c.bf16 %v854, %v854
        %v894 = vpack.c.bf16 %v855, %v855
        %s895 = scalar_lea.vmem [#allocation2], 256
        %v896 = vld [vmem:[%s895] sm:$0xff]
        %v897 = vld [vmem:[%s895 + $0x8] sm:$0xff]
        %v898 = vld [vmem:[%s895 + $0x10] sm:$0xff]
        %v899 = vld [vmem:[%s895 + $0x18] sm:$0xff]
        %v900 = vld [vmem:[%s895 + $0x20] sm:$0xff]
        %v901 = vld [vmem:[%s895 + $0x28] sm:$0xff]
        %v902 = vld [vmem:[%s895 + $0x30] sm:$0xff]
        %v903 = vld [vmem:[%s895 + $0x38] sm:$0xff]
        %v904 = vld [vmem:[%s895 + $0x40] sm:$0xff]
        %v905 = vld [vmem:[%s895 + $0x48] sm:$0xff]
        %v906 = vld [vmem:[%s895 + $0x50] sm:$0xff]
        %v907 = vld [vmem:[%s895 + $0x58] sm:$0xff]
        %v908 = vld [vmem:[%s895 + $0x60] sm:$0x33]
        %v909 = vld [vmem:[%s2] sm:$0xff]
        %v910 = vld [vmem:[%s2 + $0x8] sm:$0xff]
        %v911 = vld [vmem:[%s2 + $0x10] sm:$0xff]
        %v912 = vld [vmem:[%s2 + $0x18] sm:$0xff]
        %v913 = vld [vmem:[%s2 + $0x20] sm:$0xff]
        %v914 = vld [vmem:[%s2 + $0x28] sm:$0xff]
        %v915 = vld [vmem:[%s2 + $0x30] sm:$0xff]
        %v916 = vld [vmem:[%s2 + $0x38] sm:$0xff]
        %v917 = vld [vmem:[%s2 + $0x40] sm:$0xff]
        %v918 = vld [vmem:[%s2 + $0x48] sm:$0xff]
        %v919 = vld [vmem:[%s2 + $0x50] sm:$0xff]
        %v920 = vld [vmem:[%s2 + $0x58] sm:$0xff]
        %v921 = vld [vmem:[%s2 + $0x60] sm:$0xf]
        %923 = vset.pattern.permute.xlu0 1
        %924 = vperm.xlu0 %923, %v909
        %v925 = vpop.permute.xlu0 %924
        %928 = vset.pattern.permute.xlu0 1
        %929 = vperm.xlu0 %928, %v910
        %v930 = vpop.permute.xlu0 %929
        %933 = vset.pattern.permute.xlu0 1
        %934 = vperm.xlu0 %933, %v911
        %v935 = vpop.permute.xlu0 %934
        %938 = vset.pattern.permute.xlu0 1
        %939 = vperm.xlu0 %938, %v912
        %v940 = vpop.permute.xlu0 %939
        %943 = vset.pattern.permute.xlu0 1
        %944 = vperm.xlu0 %943, %v913
        %v945 = vpop.permute.xlu0 %944
        %948 = vset.pattern.permute.xlu0 1
        %949 = vperm.xlu0 %948, %v914
        %v950 = vpop.permute.xlu0 %949
        %953 = vset.pattern.permute.xlu0 1
        %954 = vperm.xlu0 %953, %v915
        %v955 = vpop.permute.xlu0 %954
        %958 = vset.pattern.permute.xlu0 1
        %959 = vperm.xlu0 %958, %v916
        %v960 = vpop.permute.xlu0 %959
        %963 = vset.pattern.permute.xlu0 1
        %964 = vperm.xlu0 %963, %v917
        %v965 = vpop.permute.xlu0 %964
        %968 = vset.pattern.permute.xlu0 1
        %969 = vperm.xlu0 %968, %v918
        %v970 = vpop.permute.xlu0 %969
        %973 = vset.pattern.permute.xlu0 1
        %974 = vperm.xlu0 %973, %v919
        %v975 = vpop.permute.xlu0 %974
        %978 = vset.pattern.permute.xlu0 1
        %979 = vperm.xlu0 %978, %v920
        %v980 = vpop.permute.xlu0 %979
        %983 = vset.pattern.permute.xlu0 1
        %984 = vperm.xlu0 %983, %v921
        %v985 = vpop.permute.xlu0 %984
        %v1000 = vunpack.c.l.b16 %v896
        %v1001 = vunpack.c.h.b16 %v896
        %v1002 = vunpack.c.l.b16 %v897
        %v1003 = vunpack.c.h.b16 %v897
        %v1004 = vunpack.c.l.b16 %v898
        %v1005 = vunpack.c.h.b16 %v898
        %v1006 = vunpack.c.l.b16 %v899
        %v1007 = vunpack.c.h.b16 %v899
        %v1008 = vunpack.c.l.b16 %v900
        %v1009 = vunpack.c.h.b16 %v900
        %v1010 = vunpack.c.l.b16 %v901
        %v1011 = vunpack.c.h.b16 %v901
        %v1012 = vunpack.c.l.b16 %v902
        %v1013 = vunpack.c.h.b16 %v902
        %v1014 = vunpack.c.l.b16 %v903
        %v1015 = vunpack.c.h.b16 %v903
        %v1016 = vunpack.c.l.b16 %v904
        %v1017 = vunpack.c.h.b16 %v904
        %v1018 = vunpack.c.l.b16 %v905
        %v1019 = vunpack.c.h.b16 %v905
        %v1020 = vunpack.c.l.b16 %v906
        %v1021 = vunpack.c.h.b16 %v906
        %v1022 = vunpack.c.l.b16 %v907
        %v1023 = vunpack.c.h.b16 %v907
        %v1024 = vunpack.c.l.b16 %v908
        %v1025 = vunpack.c.h.b16 %v908
        %v1026 = vpack.c.b16 %v1002, %v1000
        %v1027 = vpack.c.b16 %v1003, %v1001
        %v1028 = vpack.c.b16 %v1006, %v1004
        %v1029 = vpack.c.b16 %v1007, %v1005
        %v1030 = vpack.c.b16 %v1010, %v1008
        %v1031 = vpack.c.b16 %v1011, %v1009
        %v1032 = vpack.c.b16 %v1014, %v1012
        %v1033 = vpack.c.b16 %v1015, %v1013
        %v1034 = vpack.c.b16 %v1018, %v1016
        %v1035 = vpack.c.b16 %v1019, %v1017
        %v1036 = vpack.c.b16 %v1022, %v1020
        %v1037 = vpack.c.b16 %v1023, %v1021
        %v1038 = vpack.c.b16 %v1024, %v1024
        %v1039 = vpack.c.b16 %v1025, %v1025
        %vm1047 = vcmask 588800
        %v1049 = vsel %vm1047, %v1027, 0
        %v1052 = vsel %vm1047, %v1029, 0
        %v1055 = vsel %vm1047, %v1031, 0
        %v1058 = vsel %vm1047, %v1033, 0
        %v1061 = vsel %vm1047, %v1035, 0
        %v1064 = vsel %vm1047, %v1037, 0
        %v1067 = vsel %vm1047, %v1039, 0
        %vm1069 = vcmask 1043456
        %v1071 = vsel %vm1069, %v892, 0
        %v1074 = vsel %vm1069, %v893, 0
        %v1077 = vsel %vm1069, %v894, 0
        %1079 = vmatprep.subr.bf16.mxu0 %v878
        %1080 = vmatpush1.bf16.msra.mxu0 %v877
        %1081 = vmatprep.subr.bf16.mxu0 %v875
        %1082 = vmatpush1.bf16.msra.mxu0 %v874
        %1083 = vmatprep.subr.bf16.mxu0 %v872
        %1084 = vmatpush1.bf16.msra.mxu0 %v871
        %1085 = vmatprep.subr.bf16.mxu0 %v869
        %1086 = vmatpush1.bf16.msra.mxu0 %v868
        %1087 = vmatprep.subr.bf16.mxu0 %v866
        %1088 = vmatpush1.bf16.msra.mxu0 %v865
        %1089 = vmatprep.subr.bf16.mxu0 %v863
        %1090 = vmatpush1.bf16.msra.mxu0 %v862
        %1091 = vmatprep.subr.bf16.mxu0 %v860
        %1092 = vmatpush1.bf16.msra.mxu0 %v859
        %1093 = vmatprep.subr.bf16.mxu0 %v857
        %1094 = vmatpush1.bf16.msra.mxu0 %v856
        %1095 = vmatprep.subr.bf16.mxu0 0
        %1096 = vmatpush2.bf16.msra.mxu0 0
        %1097 = vmatprep.subr.bf16.mxu0 0
        %1098 = vmatpush2.bf16.msra.mxu0 0
        %1099 = vmatprep.subr.bf16.mxu0 0
        %1100 = vmatpush2.bf16.msra.mxu0 0
        %1101 = vmatprep.subr.bf16.mxu0 %v1074
        %1102 = vmatpush2.bf16.msra.mxu0 %v1071
        %1103 = vmatprep.subr.bf16.mxu0 %v890
        %1104 = vmatpush2.bf16.msra.mxu0 %v889
        %1105 = vmatprep.subr.bf16.mxu0 %v887
        %1106 = vmatpush2.bf16.msra.mxu0 %v886
        %1107 = vmatprep.subr.bf16.mxu0 %v884
        %1108 = vmatpush2.bf16.msra.mxu0 %v883
        %1109 = vmatprep.subr.bf16.mxu0 %v881
        %1110 = vmatpush2.bf16.msra.mxu0 %v880
        %1111 = vmatprep.mubr.bf16.mxu0 %v1049
        %1112 = vmatmul.mubr.bf16.gmra.mxu0 %v1026
        %v1113 = vpop.f32.mrf.mxu0
        %v1114 = vadd.f32 %v925, %v1113
        %v1115 = vpop.f32.mrf.mxu0
        %v1116 = vadd.f32 %v925, %v1115
        %v1117 = vpop.f32.mrf.mxu0
        %v1118 = vadd.f32 %v930, %v1117
        %v1119 = vpop.f32.mrf.mxu0
        %v1120 = vadd.f32 %v930, %v1119
        %1121 = vmatprep.mubr.bf16.mxu0 %v1052
        %1122 = vmatmul.mubr.bf16.gmra.mxu0 %v1028
        %v1123 = vpop.f32.mrf.mxu0
        %v1124 = vadd.f32 %v935, %v1123
        %v1125 = vpop.f32.mrf.mxu0
        %v1126 = vadd.f32 %v935, %v1125
        %v1127 = vpop.f32.mrf.mxu0
        %v1128 = vadd.f32 %v940, %v1127
        %v1129 = vpop.f32.mrf.mxu0
        %v1130 = vadd.f32 %v940, %v1129
        %1131 = vmatprep.mubr.bf16.mxu0 %v1055
        %1132 = vmatmul.mubr.bf16.gmra.mxu0 %v1030
        %v1133 = vpop.f32.mrf.mxu0
        %v1134 = vadd.f32 %v945, %v1133
        %v1135 = vpop.f32.mrf.mxu0
        %v1136 = vadd.f32 %v945, %v1135
        %v1137 = vpop.f32.mrf.mxu0
        %v1138 = vadd.f32 %v950, %v1137
        %v1139 = vpop.f32.mrf.mxu0
        %v1140 = vadd.f32 %v950, %v1139
        %1141 = vmatprep.mubr.bf16.mxu0 %v1058
        %1142 = vmatmul.mubr.bf16.gmra.mxu0 %v1032
        %v1143 = vpop.f32.mrf.mxu0
        %v1144 = vadd.f32 %v955, %v1143
        %v1145 = vpop.f32.mrf.mxu0
        %v1146 = vadd.f32 %v955, %v1145
        %v1147 = vpop.f32.mrf.mxu0
        %v1148 = vadd.f32 %v960, %v1147
        %v1149 = vpop.f32.mrf.mxu0
        %v1150 = vadd.f32 %v960, %v1149
        %1151 = vmatprep.mubr.bf16.mxu0 %v1061
        %1152 = vmatmul.mubr.bf16.gmra.mxu0 %v1034
        %v1153 = vpop.f32.mrf.mxu0
        %v1154 = vadd.f32 %v965, %v1153
        %v1155 = vpop.f32.mrf.mxu0
        %v1156 = vadd.f32 %v965, %v1155
        %v1157 = vpop.f32.mrf.mxu0
        %v1158 = vadd.f32 %v970, %v1157
        %v1159 = vpop.f32.mrf.mxu0
        %v1160 = vadd.f32 %v970, %v1159
        %1161 = vmatprep.mubr.bf16.mxu0 %v1064
        %1162 = vmatmul.mubr.bf16.gmra.mxu0 %v1036
        %v1163 = vpop.f32.mrf.mxu0
        %v1164 = vadd.f32 %v975, %v1163
        %v1165 = vpop.f32.mrf.mxu0
        %v1166 = vadd.f32 %v975, %v1165
        %v1167 = vpop.f32.mrf.mxu0
        %v1168 = vadd.f32 %v980, %v1167
        %v1169 = vpop.f32.mrf.mxu0
        %v1170 = vadd.f32 %v980, %v1169
        %1171 = vmatprep.mubr.bf16.mxu0 %v1067
        %1172 = vmatmul.mubr.bf16.gmra.mxu0 %v1038
        %v1173 = vpop.f32.mrf.mxu0
        %v1174 = vadd.f32 %v985, %v1173
        %v1175 = vpop.f32.mrf.mxu0
        %v1176 = vadd.f32 %v985, %v1175
        %v1177 = vpop.f32.mrf.mxu0
        %v1178 = vpop.f32.mrf.mxu0
        %1179 = vdwg.mxu0
        %1180 = vmatprep.subr.bf16.mxu0 0
        %1181 = vmatpush1.bf16.msra.mxu0 %v879
        %1182 = vmatprep.subr.bf16.mxu0 0
        %1183 = vmatpush1.bf16.msra.mxu0 %v876
        %1184 = vmatprep.subr.bf16.mxu0 0
        %1185 = vmatpush1.bf16.msra.mxu0 %v873
        %1186 = vmatprep.subr.bf16.mxu0 0
        %1187 = vmatpush1.bf16.msra.mxu0 %v870
        %1188 = vmatprep.subr.bf16.mxu0 0
        %1189 = vmatpush1.bf16.msra.mxu0 %v867
        %1190 = vmatprep.subr.bf16.mxu0 0
        %1191 = vmatpush1.bf16.msra.mxu0 %v864
        %1192 = vmatprep.subr.bf16.mxu0 0
        %1193 = vmatpush1.bf16.msra.mxu0 %v861
        %1194 = vmatprep.subr.bf16.mxu0 0
        %1195 = vmatpush1.bf16.msra.mxu0 %v858
        %1196 = vmatprep.subr.bf16.mxu0 0
        %1197 = vmatpush2.bf16.msra.mxu0 0
        %1198 = vmatprep.subr.bf16.mxu0 0
        %1199 = vmatpush2.bf16.msra.mxu0 0
        %1200 = vmatprep.subr.bf16.mxu0 0
        %1201 = vmatpush2.bf16.msra.mxu0 0
        %1202 = vmatprep.subr.bf16.mxu0 0
        %1203 = vmatpush2.bf16.msra.mxu0 %v1077
        %1204 = vmatprep.subr.bf16.mxu0 0
        %1205 = vmatpush2.bf16.msra.mxu0 %v891
        %1206 = vmatprep.subr.bf16.mxu0 0
        %1207 = vmatpush2.bf16.msra.mxu0 %v888
        %1208 = vmatprep.subr.bf16.mxu0 0
        %1209 = vmatpush2.bf16.msra.mxu0 %v885
        %1210 = vmatprep.subr.bf16.mxu0 0
        %1211 = vmatpush2.bf16.msra.mxu0 %v882
        %1212 = vmatprep.mubr.bf16.mxu0 %v1049
        %1213 = vmatmul.mubr.bf16.gmra.mxu0 %v1026
        %v1214 = vpop.f32.mrf.mxu0
        %v1215 = vadd.f32 %v925, %v1214
        %v1216 = vpop.f32.mrf.mxu0
        %v1217 = vpop.f32.mrf.mxu0
        %v1218 = vadd.f32 %v930, %v1217
        %v1219 = vpop.f32.mrf.mxu0
        %1220 = vmatprep.mubr.bf16.mxu0 %v1052
        %1221 = vmatmul.mubr.bf16.gmra.mxu0 %v1028
        %v1222 = vpop.f32.mrf.mxu0
        %v1223 = vadd.f32 %v935, %v1222
        %v1224 = vpop.f32.mrf.mxu0
        %v1225 = vpop.f32.mrf.mxu0
        %v1226 = vadd.f32 %v940, %v1225
        %v1227 = vpop.f32.mrf.mxu0
        %1228 = vmatprep.mubr.bf16.mxu0 %v1055
        %1229 = vmatmul.mubr.bf16.gmra.mxu0 %v1030
        %v1230 = vpop.f32.mrf.mxu0
        %v1231 = vadd.f32 %v945, %v1230
        %v1232 = vpop.f32.mrf.mxu0
        %v1233 = vpop.f32.mrf.mxu0
        %v1234 = vadd.f32 %v950, %v1233
        %v1235 = vpop.f32.mrf.mxu0
        %1236 = vmatprep.mubr.bf16.mxu0 %v1058
        %1237 = vmatmul.mubr.bf16.gmra.mxu0 %v1032
        %v1238 = vpop.f32.mrf.mxu0
        %v1239 = vadd.f32 %v955, %v1238
        %v1240 = vpop.f32.mrf.mxu0
        %v1241 = vpop.f32.mrf.mxu0
        %v1242 = vadd.f32 %v960, %v1241
        %v1243 = vpop.f32.mrf.mxu0
        %1244 = vmatprep.mubr.bf16.mxu0 %v1061
        %1245 = vmatmul.mubr.bf16.gmra.mxu0 %v1034
        %v1246 = vpop.f32.mrf.mxu0
        %v1247 = vadd.f32 %v965, %v1246
        %v1248 = vpop.f32.mrf.mxu0
        %v1249 = vpop.f32.mrf.mxu0
        %v1250 = vadd.f32 %v970, %v1249
        %v1251 = vpop.f32.mrf.mxu0
        %1252 = vmatprep.mubr.bf16.mxu0 %v1064
        %1253 = vmatmul.mubr.bf16.gmra.mxu0 %v1036
        %v1254 = vpop.f32.mrf.mxu0
        %v1255 = vadd.f32 %v975, %v1254
        %v1256 = vpop.f32.mrf.mxu0
        %v1257 = vpop.f32.mrf.mxu0
        %v1258 = vadd.f32 %v980, %v1257
        %v1259 = vpop.f32.mrf.mxu0
        %1260 = vmatprep.mubr.bf16.mxu0 %v1067
        %1261 = vmatmul.mubr.bf16.gmra.mxu0 %v1038
        %v1262 = vpop.f32.mrf.mxu0
        %v1263 = vadd.f32 %v985, %v1262
        %v1264 = vpop.f32.mrf.mxu0
        %v1265 = vpop.f32.mrf.mxu0
        %v1266 = vpop.f32.mrf.mxu0
        %1267 = vdwg.mxu0
        %v1268 = vtanh.pop %v1114
        %v1269 = vtanh.pop %v1116
        %v1270 = vtanh.pop %v1215
        %v1271 = vtanh.pop %v1118
        %v1272 = vtanh.pop %v1120
        %v1273 = vtanh.pop %v1218
        %v1274 = vtanh.pop %v1124
        %v1275 = vtanh.pop %v1126
        %v1276 = vtanh.pop %v1223
        %v1277 = vtanh.pop %v1128
        %v1278 = vtanh.pop %v1130
        %v1279 = vtanh.pop %v1226
        %v1280 = vtanh.pop %v1134
        %v1281 = vtanh.pop %v1136
        %v1282 = vtanh.pop %v1231
        %v1283 = vtanh.pop %v1138
        %v1284 = vtanh.pop %v1140
        %v1285 = vtanh.pop %v1234
        %v1286 = vtanh.pop %v1144
        %v1287 = vtanh.pop %v1146
        %v1288 = vtanh.pop %v1239
        %v1289 = vtanh.pop %v1148
        %v1290 = vtanh.pop %v1150
        %v1291 = vtanh.pop %v1242
        %v1292 = vtanh.pop %v1154
        %v1293 = vtanh.pop %v1156
        %v1294 = vtanh.pop %v1247
        %v1295 = vtanh.pop %v1158
        %v1296 = vtanh.pop %v1160
        %v1297 = vtanh.pop %v1250
        %v1298 = vtanh.pop %v1164
        %v1299 = vtanh.pop %v1166
        %v1300 = vtanh.pop %v1255
        %v1301 = vtanh.pop %v1168
        %v1302 = vtanh.pop %v1170
        %v1303 = vtanh.pop %v1258
        %v1304 = vtanh.pop %v1174
        %v1305 = vtanh.pop %v1176
        %v1306 = vtanh.pop %v1263
        %v1307 = vpack.c.bf16 %v1271, %v1268
        %v1308 = vpack.c.bf16 %v1272, %v1269
        %v1309 = vpack.c.bf16 %v1273, %v1270
        %v1310 = vpack.c.bf16 %v1277, %v1274
        %v1311 = vpack.c.bf16 %v1278, %v1275
        %v1312 = vpack.c.bf16 %v1279, %v1276
        %v1313 = vpack.c.bf16 %v1283, %v1280
        %v1314 = vpack.c.bf16 %v1284, %v1281
        %v1315 = vpack.c.bf16 %v1285, %v1282
        %v1316 = vpack.c.bf16 %v1289, %v1286
        %v1317 = vpack.c.bf16 %v1290, %v1287
        %v1318 = vpack.c.bf16 %v1291, %v1288
        %v1319 = vpack.c.bf16 %v1295, %v1292
        %v1320 = vpack.c.bf16 %v1296, %v1293
        %v1321 = vpack.c.bf16 %v1297, %v1294
        %v1322 = vpack.c.bf16 %v1301, %v1298
        %v1323 = vpack.c.bf16 %v1302, %v1299
        %v1324 = vpack.c.bf16 %v1303, %v1300
        %v1325 = vpack.c.bf16 %v1304, %v1304
        %v1326 = vpack.c.bf16 %v1305, %v1305
        %v1327 = vpack.c.bf16 %v1306, %v1306
        %s1328 = scalar_lea.vmem [#allocation2], 512
        %v1329 = vld [vmem:[%s1328] sm:$0xf]
        %v1330 = vld [vmem:[%s1328 + $0x8] sm:$0xf]
        %v1331 = vld [vmem:[%s1328 + $0x10] sm:$0xf]
        %v1332 = vld [vmem:[%s1328 + $0x18] sm:$0xf]
        %v1333 = vld [vmem:[%s1328 + $0x20] sm:$0xf]
        %v1334 = vld [vmem:[%s1328 + $0x28] sm:$0xf]
        %v1335 = vld [vmem:[%s1328 + $0x30] sm:$0x1]
        %v1336 = vld [vmem:[%s2] sm:$0xff]
        %v1337 = vld [vmem:[%s2 + $0x8] sm:$0xff]
        %v1338 = vld [vmem:[%s2 + $0x10] sm:$0xff]
        %v1339 = vld [vmem:[%s2 + $0x18] sm:$0xff]
        %v1340 = vld [vmem:[%s2 + $0x20] sm:$0xff]
        %v1341 = vld [vmem:[%s2 + $0x28] sm:$0xff]
        %v1342 = vld [vmem:[%s2 + $0x30] sm:$0x3]
        %1344 = vset.pattern.permute.xlu0 2
        %1345 = vperm.xlu0 %1344, %v1336
        %v1346 = vpop.permute.xlu0 %1345
        %1349 = vset.pattern.permute.xlu0 2
        %1350 = vperm.xlu0 %1349, %v1337
        %v1351 = vpop.permute.xlu0 %1350
        %1354 = vset.pattern.permute.xlu0 2
        %1355 = vperm.xlu0 %1354, %v1338
        %v1356 = vpop.permute.xlu0 %1355
        %1359 = vset.pattern.permute.xlu0 2
        %1360 = vperm.xlu0 %1359, %v1339
        %v1361 = vpop.permute.xlu0 %1360
        %1364 = vset.pattern.permute.xlu0 2
        %1365 = vperm.xlu0 %1364, %v1340
        %v1366 = vpop.permute.xlu0 %1365
        %1369 = vset.pattern.permute.xlu0 2
        %1370 = vperm.xlu0 %1369, %v1341
        %v1371 = vpop.permute.xlu0 %1370
        %1374 = vset.pattern.permute.xlu0 2
        %1375 = vperm.xlu0 %1374, %v1342
        %v1376 = vpop.permute.xlu0 %1375
        %v1385 = vunpack.c.l.b16 %v1329
        %v1386 = vunpack.c.l.b16 %v1330
        %v1387 = vunpack.c.l.b16 %v1331
        %v1388 = vunpack.c.l.b16 %v1332
        %v1389 = vunpack.c.l.b16 %v1333
        %v1390 = vunpack.c.l.b16 %v1334
        %v1391 = vunpack.c.l.b16 %v1335
        %v1392 = vpack.c.b16 %v1386, %v1385
        %v1393 = vpack.c.b16 %v1388, %v1387
        %v1394 = vpack.c.b16 %v1390, %v1389
        %v1395 = vpack.c.b16 %v1391, %v1391
        %vm1396 = vcmask 818176
        %v1398 = vsel %vm1396, %v1392, 0
        %v1401 = vsel %vm1396, %v1393, 0
        %v1404 = vsel %vm1396, %v1394, 0
        %v1407 = vsel %vm1396, %v1395, 0
        %v1410 = vsel %vm474, %v1325, 0
        %v1413 = vsel %vm474, %v1326, 0
        %v1416 = vsel %vm474, %v1327, 0
        %1418 = vmatprep.subr.bf16.mxu0 0
        %1419 = vmatpush1.bf16.msra.mxu0 0
        %1420 = vmatprep.subr.bf16.mxu0 %v1413
        %1421 = vmatpush1.bf16.msra.mxu0 %v1410
        %1422 = vmatprep.subr.bf16.mxu0 %v1323
        %1423 = vmatpush1.bf16.msra.mxu0 %v1322
        %1424 = vmatprep.subr.bf16.mxu0 %v1320
        %1425 = vmatpush1.bf16.msra.mxu0 %v1319
        %1426 = vmatprep.subr.bf16.mxu0 %v1317
        %1427 = vmatpush1.bf16.msra.mxu0 %v1316
        %1428 = vmatprep.subr.bf16.mxu0 %v1314
        %1429 = vmatpush1.bf16.msra.mxu0 %v1313
        %1430 = vmatprep.subr.bf16.mxu0 %v1311
        %1431 = vmatpush1.bf16.msra.mxu0 %v1310
        %1432 = vmatprep.subr.bf16.mxu0 %v1308
        %1433 = vmatpush1.bf16.msra.mxu0 %v1307
        %1434 = vmatprep.subr.bf16.mxu0 0
        %1435 = vmatpush2.bf16.msra.mxu0 0
        %1436 = vmatprep.subr.bf16.mxu0 0
        %1437 = vmatpush2.bf16.msra.mxu0 0
        %1438 = vmatprep.subr.bf16.mxu0 0
        %1439 = vmatpush2.bf16.msra.mxu0 0
        %1440 = vmatprep.subr.bf16.mxu0 0
        %1441 = vmatpush2.bf16.msra.mxu0 0
        %1442 = vmatprep.subr.bf16.mxu0 0
        %1443 = vmatpush2.bf16.msra.mxu0 0
        %1444 = vmatprep.subr.bf16.mxu0 0
        %1445 = vmatpush2.bf16.msra.mxu0 0
        %1446 = vmatprep.subr.bf16.mxu0 0
        %1447 = vmatpush2.bf16.msra.mxu0 0
        %1448 = vmatprep.subr.bf16.mxu0 0
        %1449 = vmatpush2.bf16.msra.mxu0 0
        %1450 = vmatprep.mubr.bf16.mxu0 0
        %1451 = vmatmul.mubr.bf16.gmra.mxu0 %v1398
        %v1452 = vpop.f32.mrf.mxu0
        %v1453 = vadd.f32 %v1346, %v1452
        %v1454 = vpop.f32.mrf.mxu0
        %v1455 = vadd.f32 %v1346, %v1454
        %v1456 = vpop.f32.mrf.mxu0
        %v1457 = vadd.f32 %v1351, %v1456
        %v1458 = vpop.f32.mrf.mxu0
        %v1459 = vadd.f32 %v1351, %v1458
        %1460 = vmatprep.mubr.bf16.mxu0 0
        %1461 = vmatmul.mubr.bf16.gmra.mxu0 %v1401
        %v1462 = vpop.f32.mrf.mxu0
        %v1463 = vadd.f32 %v1356, %v1462
        %v1464 = vpop.f32.mrf.mxu0
        %v1465 = vadd.f32 %v1356, %v1464
        %v1466 = vpop.f32.mrf.mxu0
        %v1467 = vadd.f32 %v1361, %v1466
        %v1468 = vpop.f32.mrf.mxu0
        %v1469 = vadd.f32 %v1361, %v1468
        %1470 = vmatprep.mubr.bf16.mxu0 0
        %1471 = vmatmul.mubr.bf16.gmra.mxu0 %v1404
        %v1472 = vpop.f32.mrf.mxu0
        %v1473 = vadd.f32 %v1366, %v1472
        %v1474 = vpop.f32.mrf.mxu0
        %v1475 = vadd.f32 %v1366, %v1474
        %v1476 = vpop.f32.mrf.mxu0
        %v1477 = vadd.f32 %v1371, %v1476
        %v1478 = vpop.f32.mrf.mxu0
        %v1479 = vadd.f32 %v1371, %v1478
        %1480 = vmatprep.mubr.bf16.mxu0 0
        %1481 = vmatmul.mubr.bf16.gmra.mxu0 %v1407
        %v1482 = vpop.f32.mrf.mxu0
        %v1483 = vadd.f32 %v1376, %v1482
        %v1484 = vpop.f32.mrf.mxu0
        %v1485 = vadd.f32 %v1376, %v1484
        %v1486 = vpop.f32.mrf.mxu0
        %v1487 = vpop.f32.mrf.mxu0
        %1488 = vdwg.mxu0
        %1489 = vmatprep.subr.bf16.mxu0 0
        %1490 = vmatpush1.bf16.msra.mxu0 0
        %1491 = vmatprep.subr.bf16.mxu0 0
        %1492 = vmatpush1.bf16.msra.mxu0 %v1416
        %1493 = vmatprep.subr.bf16.mxu0 0
        %1494 = vmatpush1.bf16.msra.mxu0 %v1324
        %1495 = vmatprep.subr.bf16.mxu0 0
        %1496 = vmatpush1.bf16.msra.mxu0 %v1321
        %1497 = vmatprep.subr.bf16.mxu0 0
        %1498 = vmatpush1.bf16.msra.mxu0 %v1318
        %1499 = vmatprep.subr.bf16.mxu0 0
        %1500 = vmatpush1.bf16.msra.mxu0 %v1315
        %1501 = vmatprep.subr.bf16.mxu0 0
        %1502 = vmatpush1.bf16.msra.mxu0 %v1312
        %1503 = vmatprep.subr.bf16.mxu0 0
        %1504 = vmatpush1.bf16.msra.mxu0 %v1309
        %1505 = vmatprep.subr.bf16.mxu0 0
        %1506 = vmatpush2.bf16.msra.mxu0 0
        %1507 = vmatprep.subr.bf16.mxu0 0
        %1508 = vmatpush2.bf16.msra.mxu0 0
        %1509 = vmatprep.subr.bf16.mxu0 0
        %1510 = vmatpush2.bf16.msra.mxu0 0
        %1511 = vmatprep.subr.bf16.mxu0 0
        %1512 = vmatpush2.bf16.msra.mxu0 0
        %1513 = vmatprep.subr.bf16.mxu0 0
        %1514 = vmatpush2.bf16.msra.mxu0 0
        %1515 = vmatprep.subr.bf16.mxu0 0
        %1516 = vmatpush2.bf16.msra.mxu0 0
        %1517 = vmatprep.subr.bf16.mxu0 0
        %1518 = vmatpush2.bf16.msra.mxu0 0
        %1519 = vmatprep.subr.bf16.mxu0 0
        %1520 = vmatpush2.bf16.msra.mxu0 0
        %1521 = vmatprep.mubr.bf16.mxu0 0
        %1522 = vmatmul.mubr.bf16.gmra.mxu0 %v1398
        %v1523 = vpop.f32.mrf.mxu0
        %v1524 = vadd.f32 %v1346, %v1523
        %v1525 = vpop.f32.mrf.mxu0
        %v1526 = vpop.f32.mrf.mxu0
        %v1527 = vadd.f32 %v1351, %v1526
        %v1528 = vpop.f32.mrf.mxu0
        %1529 = vmatprep.mubr.bf16.mxu0 0
        %1530 = vmatmul.mubr.bf16.gmra.mxu0 %v1401
        %v1531 = vpop.f32.mrf.mxu0
        %v1532 = vadd.f32 %v1356, %v1531
        %v1533 = vpop.f32.mrf.mxu0
        %v1534 = vpop.f32.mrf.mxu0
        %v1535 = vadd.f32 %v1361, %v1534
        %v1536 = vpop.f32.mrf.mxu0
        %1537 = vmatprep.mubr.bf16.mxu0 0
        %1538 = vmatmul.mubr.bf16.gmra.mxu0 %v1404
        %v1539 = vpop.f32.mrf.mxu0
        %v1540 = vadd.f32 %v1366, %v1539
        %v1541 = vpop.f32.mrf.mxu0
        %v1542 = vpop.f32.mrf.mxu0
        %v1543 = vadd.f32 %v1371, %v1542
        %v1544 = vpop.f32.mrf.mxu0
        %1545 = vmatprep.mubr.bf16.mxu0 0
        %1546 = vmatmul.mubr.bf16.gmra.mxu0 %v1407
        %v1547 = vpop.f32.mrf.mxu0
        %v1548 = vadd.f32 %v1376, %v1547
        %v1549 = vpop.f32.mrf.mxu0
        %v1550 = vpop.f32.mrf.mxu0
        %v1551 = vpop.f32.mrf.mxu0
        %1552 = vdwg.mxu0
        %v1553 = vtanh.pop %v1453
        %v1554 = vtanh.pop %v1455
        %v1555 = vtanh.pop %v1524
        %v1556 = vtanh.pop %v1457
        %v1557 = vtanh.pop %v1459
        %v1558 = vtanh.pop %v1527
        %v1559 = vtanh.pop %v1463
        %v1560 = vtanh.pop %v1465
        %v1561 = vtanh.pop %v1532
        %v1562 = vtanh.pop %v1467
        %v1563 = vtanh.pop %v1469
        %v1564 = vtanh.pop %v1535
        %v1565 = vtanh.pop %v1473
        %v1566 = vtanh.pop %v1475
        %v1567 = vtanh.pop %v1540
        %v1568 = vtanh.pop %v1477
        %v1569 = vtanh.pop %v1479
        %v1570 = vtanh.pop %v1543
        %v1571 = vtanh.pop %v1483
        %v1572 = vtanh.pop %v1485
        %v1573 = vtanh.pop %v1548
        %v1574 = vpack.c.bf16 %v1556, %v1553
        %v1575 = vpack.c.bf16 %v1557, %v1554
        %v1576 = vpack.c.bf16 %v1558, %v1555
        %v1577 = vpack.c.bf16 %v1562, %v1559
        %v1578 = vpack.c.bf16 %v1563, %v1560
        %v1579 = vpack.c.bf16 %v1564, %v1561
        %v1580 = vpack.c.bf16 %v1568, %v1565
        %v1581 = vpack.c.bf16 %v1569, %v1566
        %v1582 = vpack.c.bf16 %v1570, %v1567
        %v1583 = vpack.c.bf16 %v1571, %v1571
        %v1584 = vpack.c.bf16 %v1572, %v1572
        %v1585 = vpack.c.bf16 %v1573, %v1573
        %s1586 = scalar_lea.vmem [#allocation2], 768
        %v1587 = vld [vmem:[%s1586] sm:$0x3]
        %v1588 = vld [vmem:[%s2] sm:$0x7]
        %1590 = vset.pattern.permute.xlu0 3
        %1591 = vperm.xlu0 %1590, %v1588
        %v1592 = vpop.permute.xlu0 %1591
        %vm1594 = vcmask 408576
        %v1596 = vsel %vm1594, %v1587, 0
        %vm1598 = vcmask 1040384
        %v1600 = vsel %vm1598, %v1583, 0
        %v1603 = vsel %vm1598, %v1584, 0
        %v1606 = vsel %vm1598, %v1585, 0
        %1608 = vmatprep.subr.bf16.mxu0 0
        %1609 = vmatpush1.bf16.msra.mxu0 0
        %1610 = vmatprep.subr.bf16.mxu0 0
        %1611 = vmatpush1.bf16.msra.mxu0 0
        %1612 = vmatprep.subr.bf16.mxu0 0
        %1613 = vmatpush1.bf16.msra.mxu0 0
        %1614 = vmatprep.subr.bf16.mxu0 0
        %1615 = vmatpush1.bf16.msra.mxu0 0
        %1616 = vmatprep.subr.bf16.mxu0 %v1603
        %1617 = vmatpush1.bf16.msra.mxu0 %v1600
        %1618 = vmatprep.subr.bf16.mxu0 %v1581
        %1619 = vmatpush1.bf16.msra.mxu0 %v1580
        %1620 = vmatprep.subr.bf16.mxu0 %v1578
        %1621 = vmatpush1.bf16.msra.mxu0 %v1577
        %1622 = vmatprep.subr.bf16.mxu0 %v1575
        %1623 = vmatpush1.bf16.msra.mxu0 %v1574
        %1624 = vmatprep.subr.bf16.mxu0 0
        %1625 = vmatpush2.bf16.msra.mxu0 0
        %1626 = vmatprep.subr.bf16.mxu0 0
        %1627 = vmatpush2.bf16.msra.mxu0 0
        %1628 = vmatprep.subr.bf16.mxu0 0
        %1629 = vmatpush2.bf16.msra.mxu0 0
        %1630 = vmatprep.subr.bf16.mxu0 0
        %1631 = vmatpush2.bf16.msra.mxu0 0
        %1632 = vmatprep.subr.bf16.mxu0 0
        %1633 = vmatpush2.bf16.msra.mxu0 0
        %1634 = vmatprep.subr.bf16.mxu0 0
        %1635 = vmatpush2.bf16.msra.mxu0 0
        %1636 = vmatprep.subr.bf16.mxu0 0
        %1637 = vmatpush2.bf16.msra.mxu0 0
        %1638 = vmatprep.subr.bf16.mxu0 0
        %1639 = vmatpush2.bf16.msra.mxu0 0
        %1640 = vmatprep.mubr.bf16.mxu0 0
        %1641 = vmatmul.mubr.bf16.gmra.mxu0 %v1596
        %v1642 = vpop.f32.mrf.mxu0
        %v1643 = vadd.f32 %v1592, %v1642
        %v1644 = vpop.f32.mrf.mxu0
        %v1645 = vadd.f32 %v1592, %v1644
        %v1646 = vpop.f32.mrf.mxu0
        %v1647 = vpop.f32.mrf.mxu0
        %1648 = vdwg.mxu0
        %1649 = vmatprep.subr.bf16.mxu0 0
        %1650 = vmatpush1.bf16.msra.mxu0 0
        %1651 = vmatprep.subr.bf16.mxu0 0
        %1652 = vmatpush1.bf16.msra.mxu0 0
        %1653 = vmatprep.subr.bf16.mxu0 0
        %1654 = vmatpush1.bf16.msra.mxu0 0
        %1655 = vmatprep.subr.bf16.mxu0 0
        %1656 = vmatpush1.bf16.msra.mxu0 0
        %1657 = vmatprep.subr.bf16.mxu0 0
        %1658 = vmatpush1.bf16.msra.mxu0 %v1606
        %1659 = vmatprep.subr.bf16.mxu0 0
        %1660 = vmatpush1.bf16.msra.mxu0 %v1582
        %1661 = vmatprep.subr.bf16.mxu0 0
        %1662 = vmatpush1.bf16.msra.mxu0 %v1579
        %1663 = vmatprep.subr.bf16.mxu0 0
        %1664 = vmatpush1.bf16.msra.mxu0 %v1576
        %1665 = vmatprep.subr.bf16.mxu0 0
        %1666 = vmatpush2.bf16.msra.mxu0 0
        %1667 = vmatprep.subr.bf16.mxu0 0
        %1668 = vmatpush2.bf16.msra.mxu0 0
        %1669 = vmatprep.subr.bf16.mxu0 0
        %1670 = vmatpush2.bf16.msra.mxu0 0
        %1671 = vmatprep.subr.bf16.mxu0 0
        %1672 = vmatpush2.bf16.msra.mxu0 0
        %1673 = vmatprep.subr.bf16.mxu0 0
        %1674 = vmatpush2.bf16.msra.mxu0 0
        %1675 = vmatprep.subr.bf16.mxu0 0
        %1676 = vmatpush2.bf16.msra.mxu0 0
        %1677 = vmatprep.subr.bf16.mxu0 0
        %1678 = vmatpush2.bf16.msra.mxu0 0
        %1679 = vmatprep.subr.bf16.mxu0 0
        %1680 = vmatpush2.bf16.msra.mxu0 0
        %1681 = vmatprep.mubr.bf16.mxu0 0
        %1682 = vmatmul.mubr.bf16.gmra.mxu0 %v1596
        %v1683 = vpop.f32.mrf.mxu0
        %v1684 = vadd.f32 %v1592, %v1683
        %v1685 = vpop.f32.mrf.mxu0
        %v1686 = vpop.f32.mrf.mxu0
        %v1687 = vpop.f32.mrf.mxu0
        %1688 = vdwg.mxu0
        %v1689 = vtanh.pop %v1643
        %v1690 = vtanh.pop %v1645
        %v1691 = vtanh.pop %v1684
        %v1692 = vpack.c.bf16 %v1689, %v1689
        %v1693 = vpack.c.bf16 %v1690, %v1690
        %v1694 = vpack.c.bf16 %v1691, %v1691
        %s1695 = scalar_lea.vmem [#allocation2], 1024
        %v1696 = vld [vmem:[%s1695] sm:$0xf]
        %v1697 = vld [vmem:[%s1695 + $0x8] sm:$0xf]
        %v1698 = vld [vmem:[%s1695 + $0x10] sm:$0xf]
        %v1699 = vld [vmem:[%s1695 + $0x18] sm:$0xf]
        %v1700 = vld [vmem:[%s1695 + $0x20] sm:$0xf]
        %v1701 = vld [vmem:[%s1695 + $0x28] sm:$0xf]
        %v1702 = vld [vmem:[%s1695 + $0x30] sm:$0x1]
        %1703 = vset.pattern.permute.xlu0 4
        %1704 = vperm.xlu0 %1703, %v1336
        %v1705 = vpop.permute.xlu0 %1704
        %1707 = vset.pattern.permute.xlu0 4
        %1708 = vperm.xlu0 %1707, %v1337
        %v1709 = vpop.permute.xlu0 %1708
        %1711 = vset.pattern.permute.xlu0 4
        %1712 = vperm.xlu0 %1711, %v1338
        %v1713 = vpop.permute.xlu0 %1712
        %1715 = vset.pattern.permute.xlu0 4
        %1716 = vperm.xlu0 %1715, %v1339
        %v1717 = vpop.permute.xlu0 %1716
        %1719 = vset.pattern.permute.xlu0 4
        %1720 = vperm.xlu0 %1719, %v1340
        %v1721 = vpop.permute.xlu0 %1720
        %1723 = vset.pattern.permute.xlu0 4
        %1724 = vperm.xlu0 %1723, %v1341
        %v1725 = vpop.permute.xlu0 %1724
        %1727 = vset.pattern.permute.xlu0 4
        %1728 = vperm.xlu0 %1727, %v1342
        %v1729 = vpop.permute.xlu0 %1728
        %v1738 = vunpack.c.l.b16 %v1696
        %v1739 = vunpack.c.l.b16 %v1697
        %v1740 = vunpack.c.l.b16 %v1698
        %v1741 = vunpack.c.l.b16 %v1699
        %v1742 = vunpack.c.l.b16 %v1700
        %v1743 = vunpack.c.l.b16 %v1701
        %v1744 = vunpack.c.l.b16 %v1702
        %v1745 = vpack.c.b16 %v1739, %v1738
        %v1746 = vpack.c.b16 %v1741, %v1740
        %v1747 = vpack.c.b16 %v1743, %v1742
        %v1748 = vpack.c.b16 %v1744, %v1744
        %vm1749 = vcmask 23552
        %v1751 = vsel %vm1749, %v1745, 0
        %v1754 = vsel %vm1749, %v1746, 0
        %v1757 = vsel %vm1749, %v1747, 0
        %v1760 = vsel %vm1749, %v1748, 0
        %v1762 = vsel %vm1598, 4294967295, 65535
        %v1763 = vsel %vm474, %v1762, 0
        %v1765 = vand.u32 %v1692, %v1763
        %v1768 = vand.u32 %v1693, %v1763
        %v1771 = vand.u32 %v1694, %v1763
        %1773 = vmatprep.subr.bf16.mxu0 0
        %1774 = vmatpush1.bf16.msra.mxu0 0
        %1775 = vmatprep.subr.bf16.mxu0 0
        %1776 = vmatpush1.bf16.msra.mxu0 0
        %1777 = vmatprep.subr.bf16.mxu0 0
        %1778 = vmatpush1.bf16.msra.mxu0 0
        %1779 = vmatprep.subr.bf16.mxu0 0
        %1780 = vmatpush1.bf16.msra.mxu0 0
        %1781 = vmatprep.subr.bf16.mxu0 0
        %1782 = vmatpush1.bf16.msra.mxu0 0
        %1783 = vmatprep.subr.bf16.mxu0 0
        %1784 = vmatpush1.bf16.msra.mxu0 0
        %1785 = vmatprep.subr.bf16.mxu0 0
        %1786 = vmatpush1.bf16.msra.mxu0 0
        %1787 = vmatprep.subr.bf16.mxu0 %v1768
        %1788 = vmatpush1.bf16.msra.mxu0 %v1765
        %1789 = vmatprep.subr.bf16.mxu0 0
        %1790 = vmatpush2.bf16.msra.mxu0 0
        %1791 = vmatprep.subr.bf16.mxu0 0
        %1792 = vmatpush2.bf16.msra.mxu0 0
        %1793 = vmatprep.subr.bf16.mxu0 0
        %1794 = vmatpush2.bf16.msra.mxu0 0
        %1795 = vmatprep.subr.bf16.mxu0 0
        %1796 = vmatpush2.bf16.msra.mxu0 0
        %1797 = vmatprep.subr.bf16.mxu0 0
        %1798 = vmatpush2.bf16.msra.mxu0 0
        %1799 = vmatprep.subr.bf16.mxu0 0
        %1800 = vmatpush2.bf16.msra.mxu0 0
        %1801 = vmatprep.subr.bf16.mxu0 0
        %1802 = vmatpush2.bf16.msra.mxu0 0
        %1803 = vmatprep.subr.bf16.mxu0 0
        %1804 = vmatpush2.bf16.msra.mxu0 0
        %1805 = vmatprep.mubr.bf16.mxu0 0
        %1806 = vmatmul.mubr.bf16.gmra.mxu0 %v1751
        %v1807 = vpop.f32.mrf.mxu0
        %v1808 = vadd.f32 %v1705, %v1807
        %v1809 = vpop.f32.mrf.mxu0
        %v1810 = vadd.f32 %v1705, %v1809
        %v1811 = vpop.f32.mrf.mxu0
        %v1812 = vadd.f32 %v1709, %v1811
        %v1813 = vpop.f32.mrf.mxu0
        %v1814 = vadd.f32 %v1709, %v1813
        %1815 = vmatprep.mubr.bf16.mxu0 0
        %1816 = vmatmul.mubr.bf16.gmra.mxu0 %v1754
        %v1817 = vpop.f32.mrf.mxu0
        %v1818 = vadd.f32 %v1713, %v1817
        %v1819 = vpop.f32.mrf.mxu0
        %v1820 = vadd.f32 %v1713, %v1819
        %v1821 = vpop.f32.mrf.mxu0
        %v1822 = vadd.f32 %v1717, %v1821
        %v1823 = vpop.f32.mrf.mxu0
        %v1824 = vadd.f32 %v1717, %v1823
        %1825 = vmatprep.mubr.bf16.mxu0 0
        %1826 = vmatmul.mubr.bf16.gmra.mxu0 %v1757
        %v1827 = vpop.f32.mrf.mxu0
        %v1828 = vadd.f32 %v1721, %v1827
        %v1829 = vpop.f32.mrf.mxu0
        %v1830 = vadd.f32 %v1721, %v1829
        %v1831 = vpop.f32.mrf.mxu0
        %v1832 = vadd.f32 %v1725, %v1831
        %v1833 = vpop.f32.mrf.mxu0
        %v1834 = vadd.f32 %v1725, %v1833
        %1835 = vmatprep.mubr.bf16.mxu0 0
        %1836 = vmatmul.mubr.bf16.gmra.mxu0 %v1760
        %v1837 = vpop.f32.mrf.mxu0
        %v1838 = vadd.f32 %v1729, %v1837
        %v1839 = vpop.f32.mrf.mxu0
        %v1840 = vadd.f32 %v1729, %v1839
        %v1841 = vpop.f32.mrf.mxu0
        %v1842 = vpop.f32.mrf.mxu0
        %1843 = vdwg.mxu0
        %1844 = vmatprep.subr.bf16.mxu0 0
        %1845 = vmatpush1.bf16.msra.mxu0 0
        %1846 = vmatprep.subr.bf16.mxu0 0
        %1847 = vmatpush1.bf16.msra.mxu0 0
        %1848 = vmatprep.subr.bf16.mxu0 0
        %1849 = vmatpush1.bf16.msra.mxu0 0
        %1850 = vmatprep.subr.bf16.mxu0 0
        %1851 = vmatpush1.bf16.msra.mxu0 0
        %1852 = vmatprep.subr.bf16.mxu0 0
        %1853 = vmatpush1.bf16.msra.mxu0 0
        %1854 = vmatprep.subr.bf16.mxu0 0
        %1855 = vmatpush1.bf16.msra.mxu0 0
        %1856 = vmatprep.subr.bf16.mxu0 0
        %1857 = vmatpush1.bf16.msra.mxu0 0
        %1858 = vmatprep.subr.bf16.mxu0 0
        %1859 = vmatpush1.bf16.msra.mxu0 %v1771
        %1860 = vmatprep.subr.bf16.mxu0 0
        %1861 = vmatpush2.bf16.msra.mxu0 0
        %1862 = vmatprep.subr.bf16.mxu0 0
        %1863 = vmatpush2.bf16.msra.mxu0 0
        %1864 = vmatprep.subr.bf16.mxu0 0
        %1865 = vmatpush2.bf16.msra.mxu0 0
        %1866 = vmatprep.subr.bf16.mxu0 0
        %1867 = vmatpush2.bf16.msra.mxu0 0
        %1868 = vmatprep.subr.bf16.mxu0 0
        %1869 = vmatpush2.bf16.msra.mxu0 0
        %1870 = vmatprep.subr.bf16.mxu0 0
        %1871 = vmatpush2.bf16.msra.mxu0 0
        %1872 = vmatprep.subr.bf16.mxu0 0
        %1873 = vmatpush2.bf16.msra.mxu0 0
        %1874 = vmatprep.subr.bf16.mxu0 0
        %1875 = vmatpush2.bf16.msra.mxu0 0
        %1876 = vmatprep.mubr.bf16.mxu0 0
        %1877 = vmatmul.mubr.bf16.gmra.mxu0 %v1751
        %v1878 = vpop.f32.mrf.mxu0
        %v1879 = vadd.f32 %v1705, %v1878
        %v1880 = vpop.f32.mrf.mxu0
        %v1881 = vpop.f32.mrf.mxu0
        %v1882 = vadd.f32 %v1709, %v1881
        %v1883 = vpop.f32.mrf.mxu0
        %1884 = vmatprep.mubr.bf16.mxu0 0
        %1885 = vmatmul.mubr.bf16.gmra.mxu0 %v1754
        %v1886 = vpop.f32.mrf.mxu0
        %v1887 = vadd.f32 %v1713, %v1886
        %v1888 = vpop.f32.mrf.mxu0
        %v1889 = vpop.f32.mrf.mxu0
        %v1890 = vadd.f32 %v1717, %v1889
        %v1891 = vpop.f32.mrf.mxu0
        %1892 = vmatprep.mubr.bf16.mxu0 0
        %1893 = vmatmul.mubr.bf16.gmra.mxu0 %v1757
        %v1894 = vpop.f32.mrf.mxu0
        %v1895 = vadd.f32 %v1721, %v1894
        %v1896 = vpop.f32.mrf.mxu0
        %v1897 = vpop.f32.mrf.mxu0
        %v1898 = vadd.f32 %v1725, %v1897
        %v1899 = vpop.f32.mrf.mxu0
        %1900 = vmatprep.mubr.bf16.mxu0 0
        %1901 = vmatmul.mubr.bf16.gmra.mxu0 %v1760
        %v1902 = vpop.f32.mrf.mxu0
        %v1903 = vadd.f32 %v1729, %v1902
        %v1904 = vpop.f32.mrf.mxu0
        %v1905 = vpop.f32.mrf.mxu0
        %v1906 = vpop.f32.mrf.mxu0
        %1907 = vdwg.mxu0
        %v1908 = vtanh.pop %v1808
        %v1909 = vtanh.pop %v1810
        %v1910 = vtanh.pop %v1879
        %v1911 = vtanh.pop %v1812
        %v1912 = vtanh.pop %v1814
        %v1913 = vtanh.pop %v1882
        %v1914 = vtanh.pop %v1818
        %v1915 = vtanh.pop %v1820
        %v1916 = vtanh.pop %v1887
        %v1917 = vtanh.pop %v1822
        %v1918 = vtanh.pop %v1824
        %v1919 = vtanh.pop %v1890
        %v1920 = vtanh.pop %v1828
        %v1921 = vtanh.pop %v1830
        %v1922 = vtanh.pop %v1895
        %v1923 = vtanh.pop %v1832
        %v1924 = vtanh.pop %v1834
        %v1925 = vtanh.pop %v1898
        %v1926 = vtanh.pop %v1838
        %v1927 = vtanh.pop %v1840
        %v1928 = vtanh.pop %v1903
        %v1929 = vpack.c.bf16 %v1911, %v1908
        %v1930 = vpack.c.bf16 %v1912, %v1909
        %v1931 = vpack.c.bf16 %v1913, %v1910
        %v1932 = vpack.c.bf16 %v1917, %v1914
        %v1933 = vpack.c.bf16 %v1918, %v1915
        %v1934 = vpack.c.bf16 %v1919, %v1916
        %v1935 = vpack.c.bf16 %v1923, %v1920
        %v1936 = vpack.c.bf16 %v1924, %v1921
        %v1937 = vpack.c.bf16 %v1925, %v1922
        %v1938 = vpack.c.bf16 %v1926, %v1926
        %v1939 = vpack.c.bf16 %v1927, %v1927
        %v1940 = vpack.c.bf16 %v1928, %v1928
        %s1941 = scalar_lea.vmem [#allocation2], 1280
        %v1942 = vld [vmem:[%s1941] sm:$0xf]
        %v1943 = vld [vmem:[%s1941 + $0x8] sm:$0xf]
        %v1944 = vld [vmem:[%s1941 + $0x10] sm:$0xf]
        %v1945 = vld [vmem:[%s1941 + $0x18] sm:$0xf]
        %v1946 = vld [vmem:[%s1941 + $0x20] sm:$0xf]
        %v1947 = vld [vmem:[%s1941 + $0x28] sm:$0xf]
        %v1948 = vld [vmem:[%s1941 + $0x30] sm:$0xf]
        %v1949 = vld [vmem:[%s1941 + $0x38] sm:$0xf]
        %v1950 = vld [vmem:[%s1941 + $0x40] sm:$0xf]
        %v1951 = vld [vmem:[%s1941 + $0x48] sm:$0xf]
        %v1952 = vld [vmem:[%s1941 + $0x50] sm:$0xf]
        %v1953 = vld [vmem:[%s1941 + $0x58] sm:$0xf]
        %v1954 = vld [vmem:[%s1941 + $0x60] sm:$0x3]
        %1955 = vset.pattern.permute.xlu0 5
        %1956 = vperm.xlu0 %1955, %v909
        %v1957 = vpop.permute.xlu0 %1956
        %1959 = vset.pattern.permute.xlu0 5
        %1960 = vperm.xlu0 %1959, %v910
        %v1961 = vpop.permute.xlu0 %1960
        %1963 = vset.pattern.permute.xlu0 5
        %1964 = vperm.xlu0 %1963, %v911
        %v1965 = vpop.permute.xlu0 %1964
        %1967 = vset.pattern.permute.xlu0 5
        %1968 = vperm.xlu0 %1967, %v912
        %v1969 = vpop.permute.xlu0 %1968
        %1971 = vset.pattern.permute.xlu0 5
        %1972 = vperm.xlu0 %1971, %v913
        %v1973 = vpop.permute.xlu0 %1972
        %1975 = vset.pattern.permute.xlu0 5
        %1976 = vperm.xlu0 %1975, %v914
        %v1977 = vpop.permute.xlu0 %1976
        %1979 = vset.pattern.permute.xlu0 5
        %1980 = vperm.xlu0 %1979, %v915
        %v1981 = vpop.permute.xlu0 %1980
        %1983 = vset.pattern.permute.xlu0 5
        %1984 = vperm.xlu0 %1983, %v916
        %v1985 = vpop.permute.xlu0 %1984
        %1987 = vset.pattern.permute.xlu0 5
        %1988 = vperm.xlu0 %1987, %v917
        %v1989 = vpop.permute.xlu0 %1988
        %1991 = vset.pattern.permute.xlu0 5
        %1992 = vperm.xlu0 %1991, %v918
        %v1993 = vpop.permute.xlu0 %1992
        %1995 = vset.pattern.permute.xlu0 5
        %1996 = vperm.xlu0 %1995, %v919
        %v1997 = vpop.permute.xlu0 %1996
        %1999 = vset.pattern.permute.xlu0 5
        %2000 = vperm.xlu0 %1999, %v920
        %v2001 = vpop.permute.xlu0 %2000
        %2003 = vset.pattern.permute.xlu0 5
        %2004 = vperm.xlu0 %2003, %v921
        %v2005 = vpop.permute.xlu0 %2004
        %v2020 = vunpack.c.l.b16 %v1942
        %v2021 = vunpack.c.l.b16 %v1943
        %v2022 = vunpack.c.l.b16 %v1944
        %v2023 = vunpack.c.l.b16 %v1945
        %v2024 = vunpack.c.l.b16 %v1946
        %v2025 = vunpack.c.l.b16 %v1947
        %v2026 = vunpack.c.l.b16 %v1948
        %v2027 = vunpack.c.l.b16 %v1949
        %v2028 = vunpack.c.l.b16 %v1950
        %v2029 = vunpack.c.l.b16 %v1951
        %v2030 = vunpack.c.l.b16 %v1952
        %v2031 = vunpack.c.l.b16 %v1953
        %v2032 = vunpack.c.l.b16 %v1954
        %v2033 = vpack.c.b16 %v2021, %v2020
        %v2034 = vpack.c.b16 %v2023, %v2022
        %v2035 = vpack.c.b16 %v2025, %v2024
        %v2036 = vpack.c.b16 %v2027, %v2026
        %v2037 = vpack.c.b16 %v2029, %v2028
        %v2038 = vpack.c.b16 %v2031, %v2030
        %v2039 = vpack.c.b16 %v2032, %v2032
        %v2041 = vsel %vm1594, %v2033, 0
        %v2044 = vsel %vm1594, %v2034, 0
        %v2047 = vsel %vm1594, %v2035, 0
        %v2050 = vsel %vm1594, %v2036, 0
        %v2053 = vsel %vm1594, %v2037, 0
        %v2056 = vsel %vm1594, %v2038, 0
        %v2059 = vsel %vm1594, %v2039, 0
        %v2062 = vsel %vm1598, %v1938, 0
        %v2065 = vsel %vm1598, %v1939, 0
        %v2068 = vsel %vm1598, %v1940, 0
        %2070 = vmatprep.subr.bf16.mxu0 0
        %2071 = vmatpush1.bf16.msra.mxu0 0
        %2072 = vmatprep.subr.bf16.mxu0 0
        %2073 = vmatpush1.bf16.msra.mxu0 0
        %2074 = vmatprep.subr.bf16.mxu0 0
        %2075 = vmatpush1.bf16.msra.mxu0 0
        %2076 = vmatprep.subr.bf16.mxu0 0
        %2077 = vmatpush1.bf16.msra.mxu0 0
        %2078 = vmatprep.subr.bf16.mxu0 %v2065
        %2079 = vmatpush1.bf16.msra.mxu0 %v2062
        %2080 = vmatprep.subr.bf16.mxu0 %v1936
        %2081 = vmatpush1.bf16.msra.mxu0 %v1935
        %2082 = vmatprep.subr.bf16.mxu0 %v1933
        %2083 = vmatpush1.bf16.msra.mxu0 %v1932
        %2084 = vmatprep.subr.bf16.mxu0 %v1930
        %2085 = vmatpush1.bf16.msra.mxu0 %v1929
        %2086 = vmatprep.subr.bf16.mxu0 0
        %2087 = vmatpush2.bf16.msra.mxu0 0
        %2088 = vmatprep.subr.bf16.mxu0 0
        %2089 = vmatpush2.bf16.msra.mxu0 0
        %2090 = vmatprep.subr.bf16.mxu0 0
        %2091 = vmatpush2.bf16.msra.mxu0 0
        %2092 = vmatprep.subr.bf16.mxu0 0
        %2093 = vmatpush2.bf16.msra.mxu0 0
        %2094 = vmatprep.subr.bf16.mxu0 0
        %2095 = vmatpush2.bf16.msra.mxu0 0
        %2096 = vmatprep.subr.bf16.mxu0 0
        %2097 = vmatpush2.bf16.msra.mxu0 0
        %2098 = vmatprep.subr.bf16.mxu0 0
        %2099 = vmatpush2.bf16.msra.mxu0 0
        %2100 = vmatprep.subr.bf16.mxu0 0
        %2101 = vmatpush2.bf16.msra.mxu0 0
        %2102 = vmatprep.mubr.bf16.mxu0 0
        %2103 = vmatmul.mubr.bf16.gmra.mxu0 %v2041
        %v2104 = vpop.f32.mrf.mxu0
        %v2105 = vadd.f32 %v1957, %v2104
        %v2106 = vpop.f32.mrf.mxu0
        %v2107 = vadd.f32 %v1957, %v2106
        %v2108 = vpop.f32.mrf.mxu0
        %v2109 = vadd.f32 %v1961, %v2108
        %v2110 = vpop.f32.mrf.mxu0
        %v2111 = vadd.f32 %v1961, %v2110
        %2112 = vmatprep.mubr.bf16.mxu0 0
        %2113 = vmatmul.mubr.bf16.gmra.mxu0 %v2044
        %v2114 = vpop.f32.mrf.mxu0
        %v2115 = vadd.f32 %v1965, %v2114
        %v2116 = vpop.f32.mrf.mxu0
        %v2117 = vadd.f32 %v1965, %v2116
        %v2118 = vpop.f32.mrf.mxu0
        %v2119 = vadd.f32 %v1969, %v2118
        %v2120 = vpop.f32.mrf.mxu0
        %v2121 = vadd.f32 %v1969, %v2120
        %2122 = vmatprep.mubr.bf16.mxu0 0
        %2123 = vmatmul.mubr.bf16.gmra.mxu0 %v2047
        %v2124 = vpop.f32.mrf.mxu0
        %v2125 = vadd.f32 %v1973, %v2124
        %v2126 = vpop.f32.mrf.mxu0
        %v2127 = vadd.f32 %v1973, %v2126
        %v2128 = vpop.f32.mrf.mxu0
        %v2129 = vadd.f32 %v1977, %v2128
        %v2130 = vpop.f32.mrf.mxu0
        %v2131 = vadd.f32 %v1977, %v2130
        %2132 = vmatprep.mubr.bf16.mxu0 0
        %2133 = vmatmul.mubr.bf16.gmra.mxu0 %v2050
        %v2134 = vpop.f32.mrf.mxu0
        %v2135 = vadd.f32 %v1981, %v2134
        %v2136 = vpop.f32.mrf.mxu0
        %v2137 = vadd.f32 %v1981, %v2136
        %v2138 = vpop.f32.mrf.mxu0
        %v2139 = vadd.f32 %v1985, %v2138
        %v2140 = vpop.f32.mrf.mxu0
        %v2141 = vadd.f32 %v1985, %v2140
        %2142 = vmatprep.mubr.bf16.mxu0 0
        %2143 = vmatmul.mubr.bf16.gmra.mxu0 %v2053
        %v2144 = vpop.f32.mrf.mxu0
        %v2145 = vadd.f32 %v1989, %v2144
        %v2146 = vpop.f32.mrf.mxu0
        %v2147 = vadd.f32 %v1989, %v2146
        %v2148 = vpop.f32.mrf.mxu0
        %v2149 = vadd.f32 %v1993, %v2148
        %v2150 = vpop.f32.mrf.mxu0
        %v2151 = vadd.f32 %v1993, %v2150
        %2152 = vmatprep.mubr.bf16.mxu0 0
        %2153 = vmatmul.mubr.bf16.gmra.mxu0 %v2056
        %v2154 = vpop.f32.mrf.mxu0
        %v2155 = vadd.f32 %v1997, %v2154
        %v2156 = vpop.f32.mrf.mxu0
        %v2157 = vadd.f32 %v1997, %v2156
        %v2158 = vpop.f32.mrf.mxu0
        %v2159 = vadd.f32 %v2001, %v2158
        %v2160 = vpop.f32.mrf.mxu0
        %v2161 = vadd.f32 %v2001, %v2160
        %2162 = vmatprep.mubr.bf16.mxu0 0
        %2163 = vmatmul.mubr.bf16.gmra.mxu0 %v2059
        %v2164 = vpop.f32.mrf.mxu0
        %v2165 = vadd.f32 %v2005, %v2164
        %v2166 = vpop.f32.mrf.mxu0
        %v2167 = vadd.f32 %v2005, %v2166
        %v2168 = vpop.f32.mrf.mxu0
        %v2169 = vpop.f32.mrf.mxu0
        %2170 = vdwg.mxu0
        %2171 = vmatprep.subr.bf16.mxu0 0
        %2172 = vmatpush1.bf16.msra.mxu0 0
        %2173 = vmatprep.subr.bf16.mxu0 0
        %2174 = vmatpush1.bf16.msra.mxu0 0
        %2175 = vmatprep.subr.bf16.mxu0 0
        %2176 = vmatpush1.bf16.msra.mxu0 0
        %2177 = vmatprep.subr.bf16.mxu0 0
        %2178 = vmatpush1.bf16.msra.mxu0 0
        %2179 = vmatprep.subr.bf16.mxu0 0
        %2180 = vmatpush1.bf16.msra.mxu0 %v2068
        %2181 = vmatprep.subr.bf16.mxu0 0
        %2182 = vmatpush1.bf16.msra.mxu0 %v1937
        %2183 = vmatprep.subr.bf16.mxu0 0
        %2184 = vmatpush1.bf16.msra.mxu0 %v1934
        %2185 = vmatprep.subr.bf16.mxu0 0
        %2186 = vmatpush1.bf16.msra.mxu0 %v1931
        %2187 = vmatprep.subr.bf16.mxu0 0
        %2188 = vmatpush2.bf16.msra.mxu0 0
        %2189 = vmatprep.subr.bf16.mxu0 0
        %2190 = vmatpush2.bf16.msra.mxu0 0
        %2191 = vmatprep.subr.bf16.mxu0 0
        %2192 = vmatpush2.bf16.msra.mxu0 0
        %2193 = vmatprep.subr.bf16.mxu0 0
        %2194 = vmatpush2.bf16.msra.mxu0 0
        %2195 = vmatprep.subr.bf16.mxu0 0
        %2196 = vmatpush2.bf16.msra.mxu0 0
        %2197 = vmatprep.subr.bf16.mxu0 0
        %2198 = vmatpush2.bf16.msra.mxu0 0
        %2199 = vmatprep.subr.bf16.mxu0 0
        %2200 = vmatpush2.bf16.msra.mxu0 0
        %2201 = vmatprep.subr.bf16.mxu0 0
        %2202 = vmatpush2.bf16.msra.mxu0 0
        %2203 = vmatprep.mubr.bf16.mxu0 0
        %2204 = vmatmul.mubr.bf16.gmra.mxu0 %v2041
        %v2205 = vpop.f32.mrf.mxu0
        %v2206 = vadd.f32 %v1957, %v2205
        %v2207 = vpop.f32.mrf.mxu0
        %v2208 = vpop.f32.mrf.mxu0
        %v2209 = vadd.f32 %v1961, %v2208
        %v2210 = vpop.f32.mrf.mxu0
        %2211 = vmatprep.mubr.bf16.mxu0 0
        %2212 = vmatmul.mubr.bf16.gmra.mxu0 %v2044
        %v2213 = vpop.f32.mrf.mxu0
        %v2214 = vadd.f32 %v1965, %v2213
        %v2215 = vpop.f32.mrf.mxu0
        %v2216 = vpop.f32.mrf.mxu0
        %v2217 = vadd.f32 %v1969, %v2216
        %v2218 = vpop.f32.mrf.mxu0
        %2219 = vmatprep.mubr.bf16.mxu0 0
        %2220 = vmatmul.mubr.bf16.gmra.mxu0 %v2047
        %v2221 = vpop.f32.mrf.mxu0
        %v2222 = vadd.f32 %v1973, %v2221
        %v2223 = vpop.f32.mrf.mxu0
        %v2224 = vpop.f32.mrf.mxu0
        %v2225 = vadd.f32 %v1977, %v2224
        %v2226 = vpop.f32.mrf.mxu0
        %2227 = vmatprep.mubr.bf16.mxu0 0
        %2228 = vmatmul.mubr.bf16.gmra.mxu0 %v2050
        %v2229 = vpop.f32.mrf.mxu0
        %v2230 = vadd.f32 %v1981, %v2229
        %v2231 = vpop.f32.mrf.mxu0
        %v2232 = vpop.f32.mrf.mxu0
        %v2233 = vadd.f32 %v1985, %v2232
        %v2234 = vpop.f32.mrf.mxu0
        %2235 = vmatprep.mubr.bf16.mxu0 0
        %2236 = vmatmul.mubr.bf16.gmra.mxu0 %v2053
        %v2237 = vpop.f32.mrf.mxu0
        %v2238 = vadd.f32 %v1989, %v2237
        %v2239 = vpop.f32.mrf.mxu0
        %v2240 = vpop.f32.mrf.mxu0
        %v2241 = vadd.f32 %v1993, %v2240
        %v2242 = vpop.f32.mrf.mxu0
        %2243 = vmatprep.mubr.bf16.mxu0 0
        %2244 = vmatmul.mubr.bf16.gmra.mxu0 %v2056
        %v2245 = vpop.f32.mrf.mxu0
        %v2246 = vadd.f32 %v1997, %v2245
        %v2247 = vpop.f32.mrf.mxu0
        %v2248 = vpop.f32.mrf.mxu0
        %v2249 = vadd.f32 %v2001, %v2248
        %v2250 = vpop.f32.mrf.mxu0
        %2251 = vmatprep.mubr.bf16.mxu0 0
        %2252 = vmatmul.mubr.bf16.gmra.mxu0 %v2059
        %v2253 = vpop.f32.mrf.mxu0
        %v2254 = vadd.f32 %v2005, %v2253
        %v2255 = vpop.f32.mrf.mxu0
        %v2256 = vpop.f32.mrf.mxu0
        %v2257 = vpop.f32.mrf.mxu0
        %2258 = vdwg.mxu0
        %v2259 = vtanh.pop %v2105
        %v2260 = vtanh.pop %v2107
        %v2261 = vtanh.pop %v2206
        %v2262 = vtanh.pop %v2109
        %v2263 = vtanh.pop %v2111
        %v2264 = vtanh.pop %v2209
        %v2265 = vtanh.pop %v2115
        %v2266 = vtanh.pop %v2117
        %v2267 = vtanh.pop %v2214
        %v2268 = vtanh.pop %v2119
        %v2269 = vtanh.pop %v2121
        %v2270 = vtanh.pop %v2217
        %v2271 = vtanh.pop %v2125
        %v2272 = vtanh.pop %v2127
        %v2273 = vtanh.pop %v2222
        %v2274 = vtanh.pop %v2129
        %v2275 = vtanh.pop %v2131
        %v2276 = vtanh.pop %v2225
        %v2277 = vtanh.pop %v2135
        %v2278 = vtanh.pop %v2137
        %v2279 = vtanh.pop %v2230
        %v2280 = vtanh.pop %v2139
        %v2281 = vtanh.pop %v2141
        %v2282 = vtanh.pop %v2233
        %v2283 = vtanh.pop %v2145
        %v2284 = vtanh.pop %v2147
        %v2285 = vtanh.pop %v2238
        %v2286 = vtanh.pop %v2149
        %v2287 = vtanh.pop %v2151
        %v2288 = vtanh.pop %v2241
        %v2289 = vtanh.pop %v2155
        %v2290 = vtanh.pop %v2157
        %v2291 = vtanh.pop %v2246
        %v2292 = vtanh.pop %v2159
        %v2293 = vtanh.pop %v2161
        %v2294 = vtanh.pop %v2249
        %v2295 = vtanh.pop %v2165
        %v2296 = vtanh.pop %v2167
        %v2297 = vtanh.pop %v2254
        %v2298 = vpack.c.bf16 %v2262, %v2259
        %v2299 = vpack.c.bf16 %v2263, %v2260
        %v2300 = vpack.c.bf16 %v2264, %v2261
        %v2301 = vpack.c.bf16 %v2268, %v2265
        %v2302 = vpack.c.bf16 %v2269, %v2266
        %v2303 = vpack.c.bf16 %v2270, %v2267
        %v2304 = vpack.c.bf16 %v2274, %v2271
        %v2305 = vpack.c.bf16 %v2275, %v2272
        %v2306 = vpack.c.bf16 %v2276, %v2273
        %v2307 = vpack.c.bf16 %v2280, %v2277
        %v2308 = vpack.c.bf16 %v2281, %v2278
        %v2309 = vpack.c.bf16 %v2282, %v2279
        %v2310 = vpack.c.bf16 %v2286, %v2283
        %v2311 = vpack.c.bf16 %v2287, %v2284
        %v2312 = vpack.c.bf16 %v2288, %v2285
        %v2313 = vpack.c.bf16 %v2292, %v2289
        %v2314 = vpack.c.bf16 %v2293, %v2290
        %v2315 = vpack.c.bf16 %v2294, %v2291
        %v2316 = vpack.c.bf16 %v2295, %v2295
        %v2317 = vpack.c.bf16 %v2296, %v2296
        %v2318 = vpack.c.bf16 %v2297, %v2297
        %s2319 = scalar_lea.vmem [#allocation2], 1536
        %v2320 = vld [vmem:[%s2319] sm:$0xf]
        %v2321 = vld [vmem:[%s2319 + $0x8] sm:$0xf]
        %v2322 = vld [vmem:[%s2319 + $0x10] sm:$0xf]
        %v2323 = vld [vmem:[%s2319 + $0x18] sm:$0xf]
        %v2324 = vld [vmem:[%s2319 + $0x20] sm:$0xf]
        %v2325 = vld [vmem:[%s2319 + $0x28] sm:$0xf]
        %v2326 = vld [vmem:[%s2319 + $0x30] sm:$0xf]
        %v2327 = vld [vmem:[%s2319 + $0x38] sm:$0xf]
        %v2328 = vld [vmem:[%s2319 + $0x40] sm:$0xf]
        %v2329 = vld [vmem:[%s2319 + $0x48] sm:$0xf]
        %v2330 = vld [vmem:[%s2319 + $0x50] sm:$0xf]
        %v2331 = vld [vmem:[%s2319 + $0x58] sm:$0xf]
        %v2332 = vld [vmem:[%s2319 + $0x60] sm:$0xf]
        %v2333 = vld [vmem:[%s2319 + $0x68] sm:$0xf]
        %v2334 = vld [vmem:[%s2319 + $0x70] sm:$0xf]
        %v2335 = vld [vmem:[%s2319 + $0x78] sm:$0xf]
        %v2336 = vld [vmem:[%s2319 + $0x80] sm:$0xf]
        %v2337 = vld [vmem:[%s2319 + $0x88] sm:$0xf]
        %v2338 = vld [vmem:[%s2319 + $0x90] sm:$0xf]
        %v2339 = vld [vmem:[%s2319 + $0x98] sm:$0xf]
        %v2340 = vld [vmem:[%s2319 + $0xa0] sm:$0xf]
        %v2341 = vld [vmem:[%s2319 + $0xa8] sm:$0xf]
        %v2342 = vld [vmem:[%s2319 + $0xb0] sm:$0xf]
        %v2343 = vld [vmem:[%s2319 + $0xb8] sm:$0xf]
        %v2344 = vld [vmem:[%s2319 + $0xc0] sm:$0xf]
        %2345 = vset.pattern.permute.xlu0 6
        %2346 = vperm.xlu0 %2345, %v221
        %v2347 = vpop.permute.xlu0 %2346
        %2349 = vset.pattern.permute.xlu0 6
        %2350 = vperm.xlu0 %2349, %v222
        %v2351 = vpop.permute.xlu0 %2350
        %2353 = vset.pattern.permute.xlu0 6
        %2354 = vperm.xlu0 %2353, %v223
        %v2355 = vpop.permute.xlu0 %2354
        %2357 = vset.pattern.permute.xlu0 6
        %2358 = vperm.xlu0 %2357, %v224
        %v2359 = vpop.permute.xlu0 %2358
        %2361 = vset.pattern.permute.xlu0 6
        %2362 = vperm.xlu0 %2361, %v225
        %v2363 = vpop.permute.xlu0 %2362
        %2365 = vset.pattern.permute.xlu0 6
        %2366 = vperm.xlu0 %2365, %v226
        %v2367 = vpop.permute.xlu0 %2366
        %2369 = vset.pattern.permute.xlu0 6
        %2370 = vperm.xlu0 %2369, %v227
        %v2371 = vpop.permute.xlu0 %2370
        %2373 = vset.pattern.permute.xlu0 6
        %2374 = vperm.xlu0 %2373, %v228
        %v2375 = vpop.permute.xlu0 %2374
        %2377 = vset.pattern.permute.xlu0 6
        %2378 = vperm.xlu0 %2377, %v229
        %v2379 = vpop.permute.xlu0 %2378
        %2381 = vset.pattern.permute.xlu0 6
        %2382 = vperm.xlu0 %2381, %v230
        %v2383 = vpop.permute.xlu0 %2382
        %2385 = vset.pattern.permute.xlu0 6
        %2386 = vperm.xlu0 %2385, %v231
        %v2387 = vpop.permute.xlu0 %2386
        %2389 = vset.pattern.permute.xlu0 6
        %2390 = vperm.xlu0 %2389, %v232
        %v2391 = vpop.permute.xlu0 %2390
        %2393 = vset.pattern.permute.xlu0 6
        %2394 = vperm.xlu0 %2393, %v233
        %v2395 = vpop.permute.xlu0 %2394
        %2397 = vset.pattern.permute.xlu0 6
        %2398 = vperm.xlu0 %2397, %v234
        %v2399 = vpop.permute.xlu0 %2398
        %2401 = vset.pattern.permute.xlu0 6
        %2402 = vperm.xlu0 %2401, %v235
        %v2403 = vpop.permute.xlu0 %2402
        %2405 = vset.pattern.permute.xlu0 6
        %2406 = vperm.xlu0 %2405, %v236
        %v2407 = vpop.permute.xlu0 %2406
        %2409 = vset.pattern.permute.xlu0 6
        %2410 = vperm.xlu0 %2409, %v237
        %v2411 = vpop.permute.xlu0 %2410
        %2413 = vset.pattern.permute.xlu0 6
        %2414 = vperm.xlu0 %2413, %v238
        %v2415 = vpop.permute.xlu0 %2414
        %2417 = vset.pattern.permute.xlu0 6
        %2418 = vperm.xlu0 %2417, %v239
        %v2419 = vpop.permute.xlu0 %2418
        %2421 = vset.pattern.permute.xlu0 6
        %2422 = vperm.xlu0 %2421, %v240
        %v2423 = vpop.permute.xlu0 %2422
        %2425 = vset.pattern.permute.xlu0 6
        %2426 = vperm.xlu0 %2425, %v241
        %v2427 = vpop.permute.xlu0 %2426
        %2429 = vset.pattern.permute.xlu0 6
        %2430 = vperm.xlu0 %2429, %v242
        %v2431 = vpop.permute.xlu0 %2430
        %2433 = vset.pattern.permute.xlu0 6
        %2434 = vperm.xlu0 %2433, %v243
        %v2435 = vpop.permute.xlu0 %2434
        %2437 = vset.pattern.permute.xlu0 6
        %2438 = vperm.xlu0 %2437, %v244
        %v2439 = vpop.permute.xlu0 %2438
        %2441 = vset.pattern.permute.xlu0 6
        %2442 = vperm.xlu0 %2441, %v245
        %v2443 = vpop.permute.xlu0 %2442
        %v2470 = vunpack.c.l.b16 %v2320
        %v2471 = vunpack.c.l.b16 %v2321
        %v2472 = vunpack.c.l.b16 %v2322
        %v2473 = vunpack.c.l.b16 %v2323
        %v2474 = vunpack.c.l.b16 %v2324
        %v2475 = vunpack.c.l.b16 %v2325
        %v2476 = vunpack.c.l.b16 %v2326
        %v2477 = vunpack.c.l.b16 %v2327
        %v2478 = vunpack.c.l.b16 %v2328
        %v2479 = vunpack.c.l.b16 %v2329
        %v2480 = vunpack.c.l.b16 %v2330
        %v2481 = vunpack.c.l.b16 %v2331
        %v2482 = vunpack.c.l.b16 %v2332
        %v2483 = vunpack.c.l.b16 %v2333
        %v2484 = vunpack.c.l.b16 %v2334
        %v2485 = vunpack.c.l.b16 %v2335
        %v2486 = vunpack.c.l.b16 %v2336
        %v2487 = vunpack.c.l.b16 %v2337
        %v2488 = vunpack.c.l.b16 %v2338
        %v2489 = vunpack.c.l.b16 %v2339
        %v2490 = vunpack.c.l.b16 %v2340
        %v2491 = vunpack.c.l.b16 %v2341
        %v2492 = vunpack.c.l.b16 %v2342
        %v2493 = vunpack.c.l.b16 %v2343
        %v2494 = vunpack.c.l.b16 %v2344
        %v2495 = vpack.c.b16 %v2471, %v2470
        %v2496 = vpack.c.b16 %v2473, %v2472
        %v2497 = vpack.c.b16 %v2475, %v2474
        %v2498 = vpack.c.b16 %v2477, %v2476
        %v2499 = vpack.c.b16 %v2479, %v2478
        %v2500 = vpack.c.b16 %v2481, %v2480
        %v2501 = vpack.c.b16 %v2483, %v2482
        %v2502 = vpack.c.b16 %v2485, %v2484
        %v2503 = vpack.c.b16 %v2487, %v2486
        %v2504 = vpack.c.b16 %v2489, %v2488
        %v2505 = vpack.c.b16 %v2491, %v2490
        %v2506 = vpack.c.b16 %v2493, %v2492
        %v2507 = vpack.c.b16 %v2494, %v2494
        %v2509 = vsel %vm1396, %v2495, 0
        %v2512 = vsel %vm1396, %v2496, 0
        %v2515 = vsel %vm1396, %v2497, 0
        %v2518 = vsel %vm1396, %v2498, 0
        %v2521 = vsel %vm1396, %v2499, 0
        %v2524 = vsel %vm1396, %v2500, 0
        %v2527 = vsel %vm1396, %v2501, 0
        %v2530 = vsel %vm1396, %v2502, 0
        %v2533 = vsel %vm1396, %v2503, 0
        %v2536 = vsel %vm1396, %v2504, 0
        %v2539 = vsel %vm1396, %v2505, 0
        %v2542 = vsel %vm1396, %v2506, 0
        %v2545 = vsel %vm1396, %v2507, 0
        %v2548 = vsel %vm474, %v2316, 0
        %v2551 = vsel %vm474, %v2317, 0
        %v2554 = vsel %vm474, %v2318, 0
        %2556 = vmatprep.subr.bf16.mxu0 0
        %2557 = vmatpush1.bf16.msra.mxu0 0
        %2558 = vmatprep.subr.bf16.mxu0 %v2551
        %2559 = vmatpush1.bf16.msra.mxu0 %v2548
        %2560 = vmatprep.subr.bf16.mxu0 %v2314
        %2561 = vmatpush1.bf16.msra.mxu0 %v2313
        %2562 = vmatprep.subr.bf16.mxu0 %v2311
        %2563 = vmatpush1.bf16.msra.mxu0 %v2310
        %2564 = vmatprep.subr.bf16.mxu0 %v2308
        %2565 = vmatpush1.bf16.msra.mxu0 %v2307
        %2566 = vmatprep.subr.bf16.mxu0 %v2305
        %2567 = vmatpush1.bf16.msra.mxu0 %v2304
        %2568 = vmatprep.subr.bf16.mxu0 %v2302
        %2569 = vmatpush1.bf16.msra.mxu0 %v2301
        %2570 = vmatprep.subr.bf16.mxu0 %v2299
        %2571 = vmatpush1.bf16.msra.mxu0 %v2298
        %2572 = vmatprep.subr.bf16.mxu0 0
        %2573 = vmatpush2.bf16.msra.mxu0 0
        %2574 = vmatprep.subr.bf16.mxu0 0
        %2575 = vmatpush2.bf16.msra.mxu0 0
        %2576 = vmatprep.subr.bf16.mxu0 0
        %2577 = vmatpush2.bf16.msra.mxu0 0
        %2578 = vmatprep.subr.bf16.mxu0 0
        %2579 = vmatpush2.bf16.msra.mxu0 0
        %2580 = vmatprep.subr.bf16.mxu0 0
        %2581 = vmatpush2.bf16.msra.mxu0 0
        %2582 = vmatprep.subr.bf16.mxu0 0
        %2583 = vmatpush2.bf16.msra.mxu0 0
        %2584 = vmatprep.subr.bf16.mxu0 0
        %2585 = vmatpush2.bf16.msra.mxu0 0
        %2586 = vmatprep.subr.bf16.mxu0 0
        %2587 = vmatpush2.bf16.msra.mxu0 0
        %2588 = vmatprep.mubr.bf16.mxu0 0
        %2589 = vmatmul.mubr.bf16.gmra.mxu0 %v2509
        %v2590 = vpop.f32.mrf.mxu0
        %v2591 = vadd.f32 %v2347, %v2590
        %v2592 = vpop.f32.mrf.mxu0
        %v2593 = vadd.f32 %v2347, %v2592
        %v2594 = vpop.f32.mrf.mxu0
        %v2595 = vadd.f32 %v2351, %v2594
        %v2596 = vpop.f32.mrf.mxu0
        %v2597 = vadd.f32 %v2351, %v2596
        %2598 = vmatprep.mubr.bf16.mxu0 0
        %2599 = vmatmul.mubr.bf16.gmra.mxu0 %v2512
        %v2600 = vpop.f32.mrf.mxu0
        %v2601 = vadd.f32 %v2355, %v2600
        %v2602 = vpop.f32.mrf.mxu0
        %v2603 = vadd.f32 %v2355, %v2602
        %v2604 = vpop.f32.mrf.mxu0
        %v2605 = vadd.f32 %v2359, %v2604
        %v2606 = vpop.f32.mrf.mxu0
        %v2607 = vadd.f32 %v2359, %v2606
        %2608 = vmatprep.mubr.bf16.mxu0 0
        %2609 = vmatmul.mubr.bf16.gmra.mxu0 %v2515
        %v2610 = vpop.f32.mrf.mxu0
        %v2611 = vadd.f32 %v2363, %v2610
        %v2612 = vpop.f32.mrf.mxu0
        %v2613 = vadd.f32 %v2363, %v2612
        %v2614 = vpop.f32.mrf.mxu0
        %v2615 = vadd.f32 %v2367, %v2614
        %v2616 = vpop.f32.mrf.mxu0
        %v2617 = vadd.f32 %v2367, %v2616
        %2618 = vmatprep.mubr.bf16.mxu0 0
        %2619 = vmatmul.mubr.bf16.gmra.mxu0 %v2518
        %v2620 = vpop.f32.mrf.mxu0
        %v2621 = vadd.f32 %v2371, %v2620
        %v2622 = vpop.f32.mrf.mxu0
        %v2623 = vadd.f32 %v2371, %v2622
        %v2624 = vpop.f32.mrf.mxu0
        %v2625 = vadd.f32 %v2375, %v2624
        %v2626 = vpop.f32.mrf.mxu0
        %v2627 = vadd.f32 %v2375, %v2626
        %2628 = vmatprep.mubr.bf16.mxu0 0
        %2629 = vmatmul.mubr.bf16.gmra.mxu0 %v2521
        %v2630 = vpop.f32.mrf.mxu0
        %v2631 = vadd.f32 %v2379, %v2630
        %v2632 = vpop.f32.mrf.mxu0
        %v2633 = vadd.f32 %v2379, %v2632
        %v2634 = vpop.f32.mrf.mxu0
        %v2635 = vadd.f32 %v2383, %v2634
        %v2636 = vpop.f32.mrf.mxu0
        %v2637 = vadd.f32 %v2383, %v2636
        %2638 = vmatprep.mubr.bf16.mxu0 0
        %2639 = vmatmul.mubr.bf16.gmra.mxu0 %v2524
        %v2640 = vpop.f32.mrf.mxu0
        %v2641 = vadd.f32 %v2387, %v2640
        %v2642 = vpop.f32.mrf.mxu0
        %v2643 = vadd.f32 %v2387, %v2642
        %v2644 = vpop.f32.mrf.mxu0
        %v2645 = vadd.f32 %v2391, %v2644
        %v2646 = vpop.f32.mrf.mxu0
        %v2647 = vadd.f32 %v2391, %v2646
        %2648 = vmatprep.mubr.bf16.mxu0 0
        %2649 = vmatmul.mubr.bf16.gmra.mxu0 %v2527
        %v2650 = vpop.f32.mrf.mxu0
        %v2651 = vadd.f32 %v2395, %v2650
        %v2652 = vpop.f32.mrf.mxu0
        %v2653 = vadd.f32 %v2395, %v2652
        %v2654 = vpop.f32.mrf.mxu0
        %v2655 = vadd.f32 %v2399, %v2654
        %v2656 = vpop.f32.mrf.mxu0
        %v2657 = vadd.f32 %v2399, %v2656
        %2658 = vmatprep.mubr.bf16.mxu0 0
        %2659 = vmatmul.mubr.bf16.gmra.mxu0 %v2530
        %v2660 = vpop.f32.mrf.mxu0
        %v2661 = vadd.f32 %v2403, %v2660
        %v2662 = vpop.f32.mrf.mxu0
        %v2663 = vadd.f32 %v2403, %v2662
        %v2664 = vpop.f32.mrf.mxu0
        %v2665 = vadd.f32 %v2407, %v2664
        %v2666 = vpop.f32.mrf.mxu0
        %v2667 = vadd.f32 %v2407, %v2666
        %2668 = vmatprep.mubr.bf16.mxu0 0
        %2669 = vmatmul.mubr.bf16.gmra.mxu0 %v2533
        %v2670 = vpop.f32.mrf.mxu0
        %v2671 = vadd.f32 %v2411, %v2670
        %v2672 = vpop.f32.mrf.mxu0
        %v2673 = vadd.f32 %v2411, %v2672
        %v2674 = vpop.f32.mrf.mxu0
        %v2675 = vadd.f32 %v2415, %v2674
        %v2676 = vpop.f32.mrf.mxu0
        %v2677 = vadd.f32 %v2415, %v2676
        %2678 = vmatprep.mubr.bf16.mxu0 0
        %2679 = vmatmul.mubr.bf16.gmra.mxu0 %v2536
        %v2680 = vpop.f32.mrf.mxu0
        %v2681 = vadd.f32 %v2419, %v2680
        %v2682 = vpop.f32.mrf.mxu0
        %v2683 = vadd.f32 %v2419, %v2682
        %v2684 = vpop.f32.mrf.mxu0
        %v2685 = vadd.f32 %v2423, %v2684
        %v2686 = vpop.f32.mrf.mxu0
        %v2687 = vadd.f32 %v2423, %v2686
        %2688 = vmatprep.mubr.bf16.mxu0 0
        %2689 = vmatmul.mubr.bf16.gmra.mxu0 %v2539
        %v2690 = vpop.f32.mrf.mxu0
        %v2691 = vadd.f32 %v2427, %v2690
        %v2692 = vpop.f32.mrf.mxu0
        %v2693 = vadd.f32 %v2427, %v2692
        %v2694 = vpop.f32.mrf.mxu0
        %v2695 = vadd.f32 %v2431, %v2694
        %v2696 = vpop.f32.mrf.mxu0
        %v2697 = vadd.f32 %v2431, %v2696
        %2698 = vmatprep.mubr.bf16.mxu0 0
        %2699 = vmatmul.mubr.bf16.gmra.mxu0 %v2542
        %v2700 = vpop.f32.mrf.mxu0
        %v2701 = vadd.f32 %v2435, %v2700
        %v2702 = vpop.f32.mrf.mxu0
        %v2703 = vadd.f32 %v2435, %v2702
        %v2704 = vpop.f32.mrf.mxu0
        %v2705 = vadd.f32 %v2439, %v2704
        %v2706 = vpop.f32.mrf.mxu0
        %v2707 = vadd.f32 %v2439, %v2706
        %2708 = vmatprep.mubr.bf16.mxu0 0
        %2709 = vmatmul.mubr.bf16.gmra.mxu0 %v2545
        %v2710 = vpop.f32.mrf.mxu0
        %v2711 = vadd.f32 %v2443, %v2710
        %v2712 = vpop.f32.mrf.mxu0
        %v2713 = vadd.f32 %v2443, %v2712
        %v2714 = vpop.f32.mrf.mxu0
        %v2715 = vpop.f32.mrf.mxu0
        %2716 = vdwg.mxu0
        %2717 = vmatprep.subr.bf16.mxu0 0
        %2718 = vmatpush1.bf16.msra.mxu0 0
        %2719 = vmatprep.subr.bf16.mxu0 0
        %2720 = vmatpush1.bf16.msra.mxu0 %v2554
        %2721 = vmatprep.subr.bf16.mxu0 0
        %2722 = vmatpush1.bf16.msra.mxu0 %v2315
        %2723 = vmatprep.subr.bf16.mxu0 0
        %2724 = vmatpush1.bf16.msra.mxu0 %v2312
        %2725 = vmatprep.subr.bf16.mxu0 0
        %2726 = vmatpush1.bf16.msra.mxu0 %v2309
        %2727 = vmatprep.subr.bf16.mxu0 0
        %2728 = vmatpush1.bf16.msra.mxu0 %v2306
        %2729 = vmatprep.subr.bf16.mxu0 0
        %2730 = vmatpush1.bf16.msra.mxu0 %v2303
        %2731 = vmatprep.subr.bf16.mxu0 0
        %2732 = vmatpush1.bf16.msra.mxu0 %v2300
        %2733 = vmatprep.subr.bf16.mxu0 0
        %2734 = vmatpush2.bf16.msra.mxu0 0
        %2735 = vmatprep.subr.bf16.mxu0 0
        %2736 = vmatpush2.bf16.msra.mxu0 0
        %2737 = vmatprep.subr.bf16.mxu0 0
        %2738 = vmatpush2.bf16.msra.mxu0 0
        %2739 = vmatprep.subr.bf16.mxu0 0
        %2740 = vmatpush2.bf16.msra.mxu0 0
        %2741 = vmatprep.subr.bf16.mxu0 0
        %2742 = vmatpush2.bf16.msra.mxu0 0
        %2743 = vmatprep.subr.bf16.mxu0 0
        %2744 = vmatpush2.bf16.msra.mxu0 0
        %2745 = vmatprep.subr.bf16.mxu0 0
        %2746 = vmatpush2.bf16.msra.mxu0 0
        %2747 = vmatprep.subr.bf16.mxu0 0
        %2748 = vmatpush2.bf16.msra.mxu0 0
        %2749 = vmatprep.mubr.bf16.mxu0 0
        %2750 = vmatmul.mubr.bf16.gmra.mxu0 %v2509
        %v2751 = vpop.f32.mrf.mxu0
        %v2752 = vadd.f32 %v2347, %v2751
        %v2753 = vpop.f32.mrf.mxu0
        %v2754 = vpop.f32.mrf.mxu0
        %v2755 = vadd.f32 %v2351, %v2754
        %v2756 = vpop.f32.mrf.mxu0
        %2757 = vmatprep.mubr.bf16.mxu0 0
        %2758 = vmatmul.mubr.bf16.gmra.mxu0 %v2512
        %v2759 = vpop.f32.mrf.mxu0
        %v2760 = vadd.f32 %v2355, %v2759
        %v2761 = vpop.f32.mrf.mxu0
        %v2762 = vpop.f32.mrf.mxu0
        %v2763 = vadd.f32 %v2359, %v2762
        %v2764 = vpop.f32.mrf.mxu0
        %2765 = vmatprep.mubr.bf16.mxu0 0
        %2766 = vmatmul.mubr.bf16.gmra.mxu0 %v2515
        %v2767 = vpop.f32.mrf.mxu0
        %v2768 = vadd.f32 %v2363, %v2767
        %v2769 = vpop.f32.mrf.mxu0
        %v2770 = vpop.f32.mrf.mxu0
        %v2771 = vadd.f32 %v2367, %v2770
        %v2772 = vpop.f32.mrf.mxu0
        %2773 = vmatprep.mubr.bf16.mxu0 0
        %2774 = vmatmul.mubr.bf16.gmra.mxu0 %v2518
        %v2775 = vpop.f32.mrf.mxu0
        %v2776 = vadd.f32 %v2371, %v2775
        %v2777 = vpop.f32.mrf.mxu0
        %v2778 = vpop.f32.mrf.mxu0
        %v2779 = vadd.f32 %v2375, %v2778
        %v2780 = vpop.f32.mrf.mxu0
        %2781 = vmatprep.mubr.bf16.mxu0 0
        %2782 = vmatmul.mubr.bf16.gmra.mxu0 %v2521
        %v2783 = vpop.f32.mrf.mxu0
        %v2784 = vadd.f32 %v2379, %v2783
        %v2785 = vpop.f32.mrf.mxu0
        %v2786 = vpop.f32.mrf.mxu0
        %v2787 = vadd.f32 %v2383, %v2786
        %v2788 = vpop.f32.mrf.mxu0
        %2789 = vmatprep.mubr.bf16.mxu0 0
        %2790 = vmatmul.mubr.bf16.gmra.mxu0 %v2524
        %v2791 = vpop.f32.mrf.mxu0
        %v2792 = vadd.f32 %v2387, %v2791
        %v2793 = vpop.f32.mrf.mxu0
        %v2794 = vpop.f32.mrf.mxu0
        %v2795 = vadd.f32 %v2391, %v2794
        %v2796 = vpop.f32.mrf.mxu0
        %2797 = vmatprep.mubr.bf16.mxu0 0
        %2798 = vmatmul.mubr.bf16.gmra.mxu0 %v2527
        %v2799 = vpop.f32.mrf.mxu0
        %v2800 = vadd.f32 %v2395, %v2799
        %v2801 = vpop.f32.mrf.mxu0
        %v2802 = vpop.f32.mrf.mxu0
        %v2803 = vadd.f32 %v2399, %v2802
        %v2804 = vpop.f32.mrf.mxu0
        %2805 = vmatprep.mubr.bf16.mxu0 0
        %2806 = vmatmul.mubr.bf16.gmra.mxu0 %v2530
        %v2807 = vpop.f32.mrf.mxu0
        %v2808 = vadd.f32 %v2403, %v2807
        %v2809 = vpop.f32.mrf.mxu0
        %v2810 = vpop.f32.mrf.mxu0
        %v2811 = vadd.f32 %v2407, %v2810
        %v2812 = vpop.f32.mrf.mxu0
        %2813 = vmatprep.mubr.bf16.mxu0 0
        %2814 = vmatmul.mubr.bf16.gmra.mxu0 %v2533
        %v2815 = vpop.f32.mrf.mxu0
        %v2816 = vadd.f32 %v2411, %v2815
        %v2817 = vpop.f32.mrf.mxu0
        %v2818 = vpop.f32.mrf.mxu0
        %v2819 = vadd.f32 %v2415, %v2818
        %v2820 = vpop.f32.mrf.mxu0
        %2821 = vmatprep.mubr.bf16.mxu0 0
        %2822 = vmatmul.mubr.bf16.gmra.mxu0 %v2536
        %v2823 = vpop.f32.mrf.mxu0
        %v2824 = vadd.f32 %v2419, %v2823
        %v2825 = vpop.f32.mrf.mxu0
        %v2826 = vpop.f32.mrf.mxu0
        %v2827 = vadd.f32 %v2423, %v2826
        %v2828 = vpop.f32.mrf.mxu0
        %2829 = vmatprep.mubr.bf16.mxu0 0
        %2830 = vmatmul.mubr.bf16.gmra.mxu0 %v2539
        %v2831 = vpop.f32.mrf.mxu0
        %v2832 = vadd.f32 %v2427, %v2831
        %v2833 = vpop.f32.mrf.mxu0
        %v2834 = vpop.f32.mrf.mxu0
        %v2835 = vadd.f32 %v2431, %v2834
        %v2836 = vpop.f32.mrf.mxu0
        %2837 = vmatprep.mubr.bf16.mxu0 0
        %2838 = vmatmul.mubr.bf16.gmra.mxu0 %v2542
        %v2839 = vpop.f32.mrf.mxu0
        %v2840 = vadd.f32 %v2435, %v2839
        %v2841 = vpop.f32.mrf.mxu0
        %v2842 = vpop.f32.mrf.mxu0
        %v2843 = vadd.f32 %v2439, %v2842
        %v2844 = vpop.f32.mrf.mxu0
        %2845 = vmatprep.mubr.bf16.mxu0 0
        %2846 = vmatmul.mubr.bf16.gmra.mxu0 %v2545
        %v2847 = vpop.f32.mrf.mxu0
        %v2848 = vadd.f32 %v2443, %v2847
        %v2849 = vpop.f32.mrf.mxu0
        %v2850 = vpop.f32.mrf.mxu0
        %v2851 = vpop.f32.mrf.mxu0
        %2852 = vdwg.mxu0
        %v2853 = vtanh.pop %v2591
        %v2854 = vtanh.pop %v2593
        %v2855 = vtanh.pop %v2752
        %v2856 = vtanh.pop %v2595
        %v2857 = vtanh.pop %v2597
        %v2858 = vtanh.pop %v2755
        %v2859 = vtanh.pop %v2601
        %v2860 = vtanh.pop %v2603
        %v2861 = vtanh.pop %v2760
        %v2862 = vtanh.pop %v2605
        %v2863 = vtanh.pop %v2607
        %v2864 = vtanh.pop %v2763
        %v2865 = vtanh.pop %v2611
        %v2866 = vtanh.pop %v2613
        %v2867 = vtanh.pop %v2768
        %v2868 = vtanh.pop %v2615
        %v2869 = vtanh.pop %v2617
        %v2870 = vtanh.pop %v2771
        %v2871 = vtanh.pop %v2621
        %v2872 = vtanh.pop %v2623
        %v2873 = vtanh.pop %v2776
        %v2874 = vtanh.pop %v2625
        %v2875 = vtanh.pop %v2627
        %v2876 = vtanh.pop %v2779
        %v2877 = vtanh.pop %v2631
        %v2878 = vtanh.pop %v2633
        %v2879 = vtanh.pop %v2784
        %v2880 = vtanh.pop %v2635
        %v2881 = vtanh.pop %v2637
        %v2882 = vtanh.pop %v2787
        %v2883 = vtanh.pop %v2641
        %v2884 = vtanh.pop %v2643
        %v2885 = vtanh.pop %v2792
        %v2886 = vtanh.pop %v2645
        %v2887 = vtanh.pop %v2647
        %v2888 = vtanh.pop %v2795
        %v2889 = vtanh.pop %v2651
        %v2890 = vtanh.pop %v2653
        %v2891 = vtanh.pop %v2800
        %v2892 = vtanh.pop %v2655
        %v2893 = vtanh.pop %v2657
        %v2894 = vtanh.pop %v2803
        %v2895 = vtanh.pop %v2661
        %v2896 = vtanh.pop %v2663
        %v2897 = vtanh.pop %v2808
        %v2898 = vtanh.pop %v2665
        %v2899 = vtanh.pop %v2667
        %v2900 = vtanh.pop %v2811
        %v2901 = vtanh.pop %v2671
        %v2902 = vtanh.pop %v2673
        %v2903 = vtanh.pop %v2816
        %v2904 = vtanh.pop %v2675
        %v2905 = vtanh.pop %v2677
        %v2906 = vtanh.pop %v2819
        %v2907 = vtanh.pop %v2681
        %v2908 = vtanh.pop %v2683
        %v2909 = vtanh.pop %v2824
        %v2910 = vtanh.pop %v2685
        %v2911 = vtanh.pop %v2687
        %v2912 = vtanh.pop %v2827
        %v2913 = vtanh.pop %v2691
        %v2914 = vtanh.pop %v2693
        %v2915 = vtanh.pop %v2832
        %v2916 = vtanh.pop %v2695
        %v2917 = vtanh.pop %v2697
        %v2918 = vtanh.pop %v2835
        %v2919 = vtanh.pop %v2701
        %v2920 = vtanh.pop %v2703
        %v2921 = vtanh.pop %v2840
        %v2922 = vtanh.pop %v2705
        %v2923 = vtanh.pop %v2707
        %v2924 = vtanh.pop %v2843
        %v2925 = vtanh.pop %v2711
        %v2926 = vtanh.pop %v2713
        %v2927 = vtanh.pop %v2848
        %v2928 = vpack.c.bf16 %v2856, %v2853
        %v2929 = vpack.c.bf16 %v2857, %v2854
        %v2930 = vpack.c.bf16 %v2858, %v2855
        %v2931 = vpack.c.bf16 %v2862, %v2859
        %v2932 = vpack.c.bf16 %v2863, %v2860
        %v2933 = vpack.c.bf16 %v2864, %v2861
        %v2934 = vpack.c.bf16 %v2868, %v2865
        %v2935 = vpack.c.bf16 %v2869, %v2866
        %v2936 = vpack.c.bf16 %v2870, %v2867
        %v2937 = vpack.c.bf16 %v2874, %v2871
        %v2938 = vpack.c.bf16 %v2875, %v2872
        %v2939 = vpack.c.bf16 %v2876, %v2873
        %v2940 = vpack.c.bf16 %v2880, %v2877
        %v2941 = vpack.c.bf16 %v2881, %v2878
        %v2942 = vpack.c.bf16 %v2882, %v2879
        %v2943 = vpack.c.bf16 %v2886, %v2883
        %v2944 = vpack.c.bf16 %v2887, %v2884
        %v2945 = vpack.c.bf16 %v2888, %v2885
        %v2946 = vpack.c.bf16 %v2892, %v2889
        %v2947 = vpack.c.bf16 %v2893, %v2890
        %v2948 = vpack.c.bf16 %v2894, %v2891
        %v2949 = vpack.c.bf16 %v2898, %v2895
        %v2950 = vpack.c.bf16 %v2899, %v2896
        %v2951 = vpack.c.bf16 %v2900, %v2897
        %v2952 = vpack.c.bf16 %v2904, %v2901
        %v2953 = vpack.c.bf16 %v2905, %v2902
        %v2954 = vpack.c.bf16 %v2906, %v2903
        %v2955 = vpack.c.bf16 %v2910, %v2907
        %v2956 = vpack.c.bf16 %v2911, %v2908
        %v2957 = vpack.c.bf16 %v2912, %v2909
        %v2958 = vpack.c.bf16 %v2916, %v2913
        %v2959 = vpack.c.bf16 %v2917, %v2914
        %v2960 = vpack.c.bf16 %v2918, %v2915
        %v2961 = vpack.c.bf16 %v2922, %v2919
        %v2962 = vpack.c.bf16 %v2923, %v2920
        %v2963 = vpack.c.bf16 %v2924, %v2921
        %v2964 = vpack.c.bf16 %v2925, %v2925
        %v2965 = vpack.c.bf16 %v2926, %v2926
        %v2966 = vpack.c.bf16 %v2927, %v2927
        %s2967 = scalar_lea.vmem [#allocation2], 1792
        %v2968 = vld [vmem:[%s2967] sm:$0x33]
        %v2969 = vld [vmem:[%s2] sm:$0xf]
        %2971 = vset.pattern.permute.xlu0 7
        %2972 = vperm.xlu0 %2971, %v2969
        %v2973 = vpop.permute.xlu0 %2972
        %v2976 = vunpack.c.l.b16 %v2968
        %v2977 = vunpack.c.h.b16 %v2968
        %v2978 = vpack.c.b16 %v2976, %v2976
        %v2979 = vpack.c.b16 %v2977, %v2977
        %v2982 = vsel %vm1047, %v2979, 0
        %v2985 = vsel %vm1069, %v2964, 0
        %v2988 = vsel %vm1069, %v2965, 0
        %v2991 = vsel %vm1069, %v2966, 0
        %2993 = vmatprep.subr.bf16.mxu0 %v2950
        %2994 = vmatpush1.bf16.msra.mxu0 %v2949
        %2995 = vmatprep.subr.bf16.mxu0 %v2947
        %2996 = vmatpush1.bf16.msra.mxu0 %v2946
        %2997 = vmatprep.subr.bf16.mxu0 %v2944
        %2998 = vmatpush1.bf16.msra.mxu0 %v2943
        %2999 = vmatprep.subr.bf16.mxu0 %v2941
        %3000 = vmatpush1.bf16.msra.mxu0 %v2940
        %3001 = vmatprep.subr.bf16.mxu0 %v2938
        %3002 = vmatpush1.bf16.msra.mxu0 %v2937
        %3003 = vmatprep.subr.bf16.mxu0 %v2935
        %3004 = vmatpush1.bf16.msra.mxu0 %v2934
        %3005 = vmatprep.subr.bf16.mxu0 %v2932
        %3006 = vmatpush1.bf16.msra.mxu0 %v2931
        %3007 = vmatprep.subr.bf16.mxu0 %v2929
        %3008 = vmatpush1.bf16.msra.mxu0 %v2928
        %3009 = vmatprep.subr.bf16.mxu0 0
        %3010 = vmatpush2.bf16.msra.mxu0 0
        %3011 = vmatprep.subr.bf16.mxu0 0
        %3012 = vmatpush2.bf16.msra.mxu0 0
        %3013 = vmatprep.subr.bf16.mxu0 0
        %3014 = vmatpush2.bf16.msra.mxu0 0
        %3015 = vmatprep.subr.bf16.mxu0 %v2988
        %3016 = vmatpush2.bf16.msra.mxu0 %v2985
        %3017 = vmatprep.subr.bf16.mxu0 %v2962
        %3018 = vmatpush2.bf16.msra.mxu0 %v2961
        %3019 = vmatprep.subr.bf16.mxu0 %v2959
        %3020 = vmatpush2.bf16.msra.mxu0 %v2958
        %3021 = vmatprep.subr.bf16.mxu0 %v2956
        %3022 = vmatpush2.bf16.msra.mxu0 %v2955
        %3023 = vmatprep.subr.bf16.mxu0 %v2953
        %3024 = vmatpush2.bf16.msra.mxu0 %v2952
        %3025 = vmatprep.mubr.bf16.mxu0 %v2982
        %3026 = vmatmul.mubr.bf16.gmra.mxu0 %v2978
        %v3027 = vpop.f32.mrf.mxu0
        %v3028 = vadd.f32 %v2973, %v3027
        %v3029 = vpop.f32.mrf.mxu0
        %v3030 = vadd.f32 %v2973, %v3029
        %v3031 = vpop.f32.mrf.mxu0
        %v3032 = vpop.f32.mrf.mxu0
        %3033 = vdwg.mxu0
        %3034 = vmatprep.subr.bf16.mxu0 0
        %3035 = vmatpush1.bf16.msra.mxu0 %v2951
        %3036 = vmatprep.subr.bf16.mxu0 0
        %3037 = vmatpush1.bf16.msra.mxu0 %v2948
        %3038 = vmatprep.subr.bf16.mxu0 0
        %3039 = vmatpush1.bf16.msra.mxu0 %v2945
        %3040 = vmatprep.subr.bf16.mxu0 0
        %3041 = vmatpush1.bf16.msra.mxu0 %v2942
        %3042 = vmatprep.subr.bf16.mxu0 0
        %3043 = vmatpush1.bf16.msra.mxu0 %v2939
        %3044 = vmatprep.subr.bf16.mxu0 0
        %3045 = vmatpush1.bf16.msra.mxu0 %v2936
        %3046 = vmatprep.subr.bf16.mxu0 0
        %3047 = vmatpush1.bf16.msra.mxu0 %v2933
        %3048 = vmatprep.subr.bf16.mxu0 0
        %3049 = vmatpush1.bf16.msra.mxu0 %v2930
        %3050 = vmatprep.subr.bf16.mxu0 0
        %3051 = vmatpush2.bf16.msra.mxu0 0
        %3052 = vmatprep.subr.bf16.mxu0 0
        %3053 = vmatpush2.bf16.msra.mxu0 0
        %3054 = vmatprep.subr.bf16.mxu0 0
        %3055 = vmatpush2.bf16.msra.mxu0 0
        %3056 = vmatprep.subr.bf16.mxu0 0
        %3057 = vmatpush2.bf16.msra.mxu0 %v2991
        %3058 = vmatprep.subr.bf16.mxu0 0
        %3059 = vmatpush2.bf16.msra.mxu0 %v2963
        %3060 = vmatprep.subr.bf16.mxu0 0
        %3061 = vmatpush2.bf16.msra.mxu0 %v2960
        %3062 = vmatprep.subr.bf16.mxu0 0
        %3063 = vmatpush2.bf16.msra.mxu0 %v2957
        %3064 = vmatprep.subr.bf16.mxu0 0
        %3065 = vmatpush2.bf16.msra.mxu0 %v2954
        %3066 = vmatprep.mubr.bf16.mxu0 %v2982
        %3067 = vmatmul.mubr.bf16.gmra.mxu0 %v2978
        %v3068 = vpop.f32.mrf.mxu0
        %v3069 = vadd.f32 %v2973, %v3068
        %v3070 = vpop.f32.mrf.mxu0
        %v3071 = vpop.f32.mrf.mxu0
        %v3072 = vpop.f32.mrf.mxu0
        %3073 = vdwg.mxu0
        %v3076 = vcombine.low %v3028, %v3030
        %3078 = vst [vmem:[%s179] sm:$0xff] %v3076
        %3079 = vst [vmem:[%s179 + $0x8] sm:$0xf] %v3069
        %s3080 = sand.u32 %s94, 1
        %s3081 = scalar_lea.sflag [#allocation4], %s3080
        %s3082 = sand.u32 %s94, 1
        %s3083 = smul.addr %s3082, 12
        %s3084 = scalar_lea.vmem [#allocation5], %s3083
        // Predicated region
        $region37: #{tpu_custom_call.1} parent=31 // pred_check
          %p3085 = pneg %p104
        $region38: #{tpu_custom_call.1} parent=31 // pred_check_branch
          %3087 = sbr.rel (%p3085) target = $region40
        $region39: #{tpu_custom_call.1} parent=31 // pred_region
          %s3088 = smul.u32 3, %s18
          %s3090 = ssub.s32 192, 192
          %3091 = vsyncadd %s3081, %s3090
          %s3092 = smul.addr %s3088, 64
          %s3093 = scalar_lea.hbm %s3, %s3092
          %s3095 = sshll.u32 %s3084, 4
          %s3096 = int_to_ptr.vmem [resolvable:$true] %s3095
          %3098 = dma.vmem_to_hbm [thread:$0]  %s3096, 192, %s3093, %s3081
        $region40: #{tpu_custom_call.1} parent=31 // pred_fallthru
          _
      $region32: #{tpu_custom_call.1} parent=5 // pred_fallthru
        _
      %p3099 = scmp.le.s32.totalorder 2, %s13
      // Predicated region
      $region41: #{tpu_custom_call.1} parent=5 // pred_check
        %p3100 = pneg %p3099
      $region42: #{tpu_custom_call.1} parent=5 // pred_check_branch
        %3102 = sbr.rel (%p3100) target = $region44
      $region43: #{tpu_custom_call.1} parent=5 // pred_region
        %s3103 = ssub.s32 %s13, 2
        // Predicated region
        $region45: #{tpu_custom_call.1} parent=43 // pred_check
          %p3104 = pneg %p110
        $region46: #{tpu_custom_call.1} parent=43 // pred_check_branch
          %3106 = sbr.rel (%p3104) target = $region48
        $region47: #{tpu_custom_call.1} parent=43 // pred_region
          %s3107 = sand.u32 %s95, 1
          %s3108 = scalar_lea.sflag [#allocation4], %s3107
          %s3109 = sand.u32 %s95, 1
          %s3110 = smul.addr %s3109, 12
          %s3111 = scalar_lea.vmem [#allocation5], %s3110
          %3112 = dma.done %s3108, 192
        $region48: #{tpu_custom_call.1} parent=43 // pred_fallthru
          _
      $region44: #{tpu_custom_call.1} parent=5 // pred_fallthru
        _
    $region6: #{tpu_custom_call.1} parent=1 // loop_footer
      %s17 = sadd.s32 1, %s13
    $region7: #{tpu_custom_call.1} parent=1 // loop_footer_branch
      %12 = sbr.rel target = $region3
    $region8: #{tpu_custom_call.1} parent=1 // loop_exit
      _
    %3113 = vsyncpa [#allocation3], 1
    %s3114 = scalar_lea.sflag [#allocation3], 1
    %3115 = vsyncpa %s3114, 1
    %3116 = vsyncpa [#allocation4], 1
    %s3117 = scalar_lea.sflag [#allocation4], 1
    %3118 = vsyncpa %s3117, 1

</llo_original>
